<compile_context>
chip_gen: v6e
topology: v6e:2x2x1
jax: 0.10.0
libtpu: 0.0.40
codegen_flags: <defaults>
</compile_context>

<pallas_src>
import functools
import math

import jax
import jax.numpy as jnp
from jax import lax
from jax.experimental import pallas as pl
from jax.experimental.pallas import tpu as pltpu

_EPS = 1e-5
# HBM round-trip dtype for the att_v / att_vp intermediate (dominant HBM term).
_ATT_DTYPE = jnp.bfloat16


# --------------------------- in-kernel helpers -------------------------------

def _conv_relu_channel(x_ref, w_ref, o, C):
    """relu( sum_c w[o,c] * x[c] )  ->  (L, Bb) tile, B on lanes."""
    acc = w_ref[o, 0] * x_ref[0]
    for c in range(1, C):
        acc = acc + w_ref[o, c] * x_ref[c]
    return jnp.maximum(acc, 0.0)


def _bn1_channel(x_ref, w_ref, s1_ref, t1_ref, o, C, mask=None):
    """BN1(relu(conv1x1(x)))[o] with BN1 folded to a per-channel affine."""
    a = _conv_relu_channel(x_ref, w_ref, o, C) * s1_ref[o] + t1_ref[o]
    if mask is not None:
        a = a * mask
    return a


def _lane_mask(shape_lb, block_b, b_true):
    """1.0 for real batch columns, 0.0 for lane-padding columns."""
    col = lax.broadcasted_iota(jnp.int32, shape_lb, 1) + pl.program_id(0) * block_b
    return (col < b_true).astype(jnp.float32)


def _sum11(t):
    return jnp.sum(t).reshape(1, 1)


def _write_stats(st_ref, sums, sqs):
    sum_row = jnp.concatenate(sums, axis=1)        # (1, n_channels)
    sq_row = jnp.concatenate(sqs, axis=1)          # (1, n_channels)
    st_ref[...] = jnp.concatenate([sum_row, sq_row], axis=0)[None]   # (1, 2, n)


# ------------------------------ kernels --------------------------------------

def _bn1_stats_kernel(x_ref, w_ref, st_ref, *, C, O):
    """Pass 1: per-tile sum / sum-of-squares of relu(conv(x)) per conv channel.

    Zero-padded batch columns contribute exactly zero, so no mask is needed.
    """
    sums, sqs = [], []
    for o in range(O):
        a = _conv_relu_channel(x_ref, w_ref, o, C)
        sums.append(_sum11(a))
        sqs.append(_sum11(a * a))
    _write_stats(st_ref, sums, sqs)


def _score_stats_kernel(x_ref, aux_ref, w_ref, s1_ref, t1_ref, st_ref,
                        *, C, head_dim, qk_dim, v_dim, block_b, b_true, padded):
    """Pass 2: norm_attention batch statistics, computed ANALYTICALLY.

    sum(qk)   = sum_j (col-sum q_j) * (col-sum k_j)
    sum(qk^2) = sum_{j,j'} Gram_p(q_j,q_j') * Gram_p(k_j,k_j')
    qr / kr sums use precomputed gated-pos row-sums and (qk_dim,qk_dim,L)
    pos Gram matrices (aux_ref), so no (L,L,Bb) tensor is ever materialized.
    """
    HD = head_dim
    head_planes = 2 * qk_dim + v_dim
    L = x_ref.shape[1]
    mask = _lane_mask((L, block_b), block_b, b_true) if padded else None

    off_rq, off_rk = 0, qk_dim
    off_gq = 2 * qk_dim
    off_gk = off_gq + qk_dim * qk_dim

    sums = [None] * (3 * HD)
    sqs = [None] * (3 * HD)
    for hd in range(HD):
        base = hd * head_planes
        q = [_bn1_channel(x_ref, w_ref, s1_ref, t1_ref, base + j, C, mask)
             for j in range(qk_dim)]
        k = [_bn1_channel(x_ref, w_ref, s1_ref, t1_ref, base + qk_dim + j, C, mask)
             for j in range(qk_dim)]
        qq = [[q[j] * q[jp] for jp in range(qk_dim)] for j in range(qk_dim)]
        kk = [[k[j] * k[jp] for jp in range(qk_dim)] for j in range(qk_dim)]

        # ---- qk branch (BN_A channel hd) ------------------------------------
        s_qk = jnp.zeros((1, 1), jnp.float32)
        ss_qk = jnp.zeros((1, 1), jnp.float32)
        for j in range(qk_dim):
            cq = jnp.sum(q[j], axis=0, keepdims=True)        # (1, Bb)
            ck = jnp.sum(k[j], axis=0, keepdims=True)
            s_qk = s_qk + _sum11(cq * ck)
        for j in range(qk_dim):
            for jp in range(qk_dim):
                gq = jnp.sum(qq[j][jp], axis=0, keepdims=True)   # (1, Bb)
                gk = jnp.sum(kk[j][jp], axis=0, keepdims=True)
                ss_qk = ss_qk + _sum11(gq * gk)
        sums[hd], sqs[hd] = s_qk, ss_qk

        # ---- qr branch (BN_A channel HD+hd) ----------------------------------
        s_qr = jnp.zeros((1, 1), jnp.float32)
        ss_qr = jnp.zeros((1, 1), jnp.float32)
        for j in range(qk_dim):
            qs = jnp.sum(q[j], axis=1, keepdims=True)            # (L, 1)
            s_qr = s_qr + _sum11(qs * aux_ref[off_rq + j])
        for j in range(qk_dim):
            for jp in range(qk_dim):
                qqs = jnp.sum(qq[j][jp], axis=1, keepdims=True)  # (L, 1)
                ss_qr = ss_qr + _sum11(qqs * aux_ref[off_gq + j * qk_dim + jp])
        sums[HD + hd], sqs[HD + hd] = s_qr, ss_qr

        # ---- kr branch (BN_A channel 2*HD+hd) --------------------------------
        s_kr = jnp.zeros((1, 1), jnp.float32)
        ss_kr = jnp.zeros((1, 1), jnp.float32)
        for j in range(qk_dim):
            ks = jnp.sum(k[j], axis=1, keepdims=True)
            s_kr = s_kr + _sum11(ks * aux_ref[off_rk + j])
        for j in range(qk_dim):
            for jp in range(qk_dim):
                kks = jnp.sum(kk[j][jp], axis=1, keepdims=True)
                ss_kr = ss_kr + _sum11(kks * aux_ref[off_gk + j * qk_dim + jp])
        sums[2 * HD + hd], sqs[2 * HD + hd] = s_kr, ss_kr
    _write_stats(st_ref, sums, sqs)


def _attention_kernel(x_ref, pos_ref, w_ref, s1_ref, t1_ref, sa_ref, ta_ref,
                      att_ref, st_ref,
                      *, C, head_dim, qk_dim, v_dim, block_b, b_true, padded):
    """Pass 3: fused norm_attention affine + softmax + value aggregation.

    Writes raw att_v / att_vp (pre norm_v, bf16) and per-tile norm_v stats.
    Scalar gates are already folded into pos_ref (qr/kr/v_pos) and s1/t1 (v).
    """
    HD = head_dim
    head_planes = 2 * qk_dim + v_dim
    L = x_ref.shape[1]
    mask = _lane_mask((L, block_b), block_b, b_true) if padded else None

    # Head-invariant relative-position broadcasts, hoisted out of the head loop.
    qpos_b = [pos_ref[j][:, :, None] for j in range(qk_dim)]
    kpos_b = [pos_ref[qk_dim + j][:, :, None] for j in range(qk_dim)]
    vpos_b = [pos_ref[2 * qk_dim + c][:, :, None] for c in range(v_dim)]

    v_sum, v_sq, vp_sum, vp_sq = [], [], [], []
    for hd in range(HD):
        base = hd * head_planes
        q = [_bn1_channel(x_ref, w_ref, s1_ref, t1_ref, base + j, C)
             for j in range(qk_dim)]
        k = [_bn1_channel(x_ref, w_ref, s1_ref, t1_ref, base + qk_dim + j, C)
             for j in range(qk_dim)]
        qb = [qj[:, None, :] for qj in q]         # q at query/row position
        kb_row = [kj[:, None, :] for kj in k]     # k at row position (kr term)
        kb_col = [kj[None, :, :] for kj in k]     # k at key position (qk term)

        qk = qb[0] * kb_col[0]
        qr = qb[0] * qpos_b[0]
        kr = kb_row[0] * kpos_b[0]
        for j in range(1, qk_dim):
            qk = qk + qb[j] * kb_col[j]
            qr = qr + qb[j] * qpos_b[j]
            kr = kr + kb_row[j] * kpos_b[j]

        # norm_attention (BN2d) affine fused into one accumulator + branch sum
        t_all = ta_ref[hd] + ta_ref[HD + hd] + ta_ref[2 * HD + hd]
        att = (qk * sa_ref[hd] + qr * sa_ref[HD + hd]
               + kr * sa_ref[2 * HD + hd] + t_all)
        # softmax over the key axis (axis=1 of (L_q, L_k, Bb))
        att = att - jnp.max(att, axis=1, keepdims=True)
        e = jnp.exp(att)
        p = e * pl.reciprocal(jnp.sum(e, axis=1, keepdims=True), approx=True)

        sv = jnp.zeros((1, 1), jnp.float32)
        sv2 = jnp.zeros((1, 1), jnp.float32)
        svp = jnp.zeros((1, 1), jnp.float32)
        svp2 = jnp.zeros((1, 1), jnp.float32)
        for c in range(v_dim):
            # gate_v is folded into s1/t1 for the value channels; masking the
            # value channel makes av vanish in padded columns automatically.
            vch = _bn1_channel(x_ref, w_ref, s1_ref, t1_ref,
                               base + 2 * qk_dim + c, C, mask)   # (L_k, Bb)
            av = jnp.sum(p * vch[None, :, :], axis=1)            # (L_q, Bb)
            avp = jnp.sum(p * vpos_b[c], axis=1)                 # (L_q, Bb)
            if padded:
                avp = avp * mask
            att_ref[hd * v_dim + c] = av.astype(att_ref.dtype)            # att_v
            att_ref[HD * v_dim + hd * v_dim + c] = avp.astype(att_ref.dtype)  # att_vp
            sv = sv + _sum11(av)
            sv2 = sv2 + _sum11(av * av)
            svp = svp + _sum11(avp)
            svp2 = svp2 + _sum11(avp * avp)
        v_sum.append(sv)
        v_sq.append(sv2)
        vp_sum.append(svp)
        vp_sq.append(svp2)
    # norm_v channel order: [att_v heads..., att_vp heads...]
    _write_stats(st_ref, v_sum + vp_sum, v_sq + vp_sq)


def _output_kernel(att_ref, sv_ref, tv_ref, out_ref, *, head_dim, v_dim):
    """Pass 4: norm_v affine + sum of the value / positional-value branches."""
    HD = head_dim
    for hd in range(HD):
        s_v, t_v = sv_ref[hd], tv_ref[hd]
        s_vp, t_vp = sv_ref[HD + hd], tv_ref[HD + hd]
        for c in range(v_dim):
            oc = hd * v_dim + c
            out_ref[oc] = (att_ref[oc] * s_v
                           + att_ref[HD * v_dim + oc] * s_vp
                           + (t_v + t_vp)).astype(out_ref.dtype)


# ------------------------------ wrapper ---------------------------------------

def _bn_scale_shift(stat, count, gamma, beta, eps=_EPS):
    """Fold batch-stat sums into a per-channel affine (training-mode BN)."""
    mean = stat[:, 0, :].sum(axis=0) / count
    var = stat[:, 1, :].sum(axis=0) / count - mean * mean
    var = jnp.maximum(var, 0.0)
    scale = gamma.astype(jnp.float32) * lax.rsqrt(var + eps)
    shift = beta.astype(jnp.float32) - mean * scale
    return scale, shift


def _vmem_capacity_bytes():
    try:
        return int(pltpu.get_tpu_info().vmem_capacity_bytes)
    except Exception:
        return 64 * 1024 * 1024   # conservative (v7x per-TensorCore VMEM)


def _pick_block_b(B_pad, per_col_bytes, budget_bytes, prefer_even_grid):
    """Largest multiple-of-128 divisor of B_pad whose working set fits budget."""
    best = 128
    for cand in range(128, B_pad + 1, 128):
        if B_pad % cand == 0 and cand * per_col_bytes <= budget_bytes:
            best = cand
    if prefer_even_grid:
        # v7x: make nb even/>=2 so the "parallel" grid axis feeds both TCs.
        while (B_pad // best) % 2 == 1 and best % 256 == 0:
            best //= 2
    return best


def gated_axial_attention_block(x, params, *, head_dim, pos_dim, h_w='h'):
    """x: NCHW (b, c, h, w) float32 -> (b, out_planes, h, w)."""
    x = x.astype(jnp.float32)
    b, C, h, w = x.shape
    if h_w.upper() == 'H':
        L, B = h, b * w
        x_clb = jnp.transpose(x, (1, 2, 0, 3)).reshape(C, L, B)    # (C, h, b*w)
    else:
        L, B = w, b * h
        x_clb = jnp.transpose(x, (1, 3, 0, 2)).reshape(C, L, B)    # (C, w, b*h)
    assert L == pos_dim, "pos_dim must equal the attention-axis length"

    conv_w = params['conv_w'].astype(jnp.float32)                  # (O, C)
    O = conv_w.shape[0]
    head_planes = O // head_dim
    assert head_planes % 4 == 0, "head_planes must be divisible by 4"
    qk_dim, v_dim = head_planes // 4, head_planes // 2
    HD = head_dim
    out_planes = HD * v_dim

    # ---- pad the flattened batch (lane axis) to a multiple of 128 -----------
    B_pad = ((B + 127) // 128) * 128
    padded = B_pad != B
    if padded:
        x_clb = jnp.pad(x_clb, ((0, 0), (0, 0), (0, B_pad - B)))

    # ---- relative-position gather + scalar-gate folding ----------------------
    q_idx = jnp.arange(pos_dim)[:, None]
    k_idx = jnp.arange(pos_dim)[None, :]
    idx = (q_idx - k_idx + pos_dim - 1).reshape(-1)
    pos_g = jnp.take(params['pos_relative'].astype(jnp.float32), idx, axis=1)
    pos_g = pos_g.reshape(head_planes, pos_dim, pos_dim)
    gate_rows = jnp.concatenate([
        jnp.broadcast_to(params['gate_qr'].astype(jnp.float32), (qk_dim,)),
        jnp.broadcast_to(params['gate_kr'].astype(jnp.float32), (qk_dim,)),
        jnp.broadcast_to(params['gate_v_pos'].astype(jnp.float32), (v_dim,))])
    pos_g = pos_g * gate_rows[:, None, None]    # gates folded into pos tensor

    # analytic BN_A helpers: gated-pos row sums + (qk_dim,qk_dim,L) pos Grams
    qpos, kpos = pos_g[:qk_dim], pos_g[qk_dim:2 * qk_dim]
    rq = qpos.sum(axis=2)                                        # (qk_dim, L)
    rk = kpos.sum(axis=2)
    gpq = jnp.einsum('jpi,kpi->jkp', qpos, qpos).reshape(qk_dim * qk_dim, L)
    gpk = jnp.einsum('jpi,kpi->jkp', kpos, kpos).reshape(qk_dim * qk_dim, L)
    pos_aux = jnp.concatenate([rq, rk, gpq, gpk], axis=0)[:, :, None]
    K_aux = pos_aux.shape[0]

    # ---- VMEM-budget-aware, per-pass tile sizes -------------------------------
    vmem_cap = _vmem_capacity_bytes()
    budget = min(vmem_cap // 3, 48 * 1024 * 1024)
    vmem_limit = int(min(vmem_cap * 5 // 8, 96 * 1024 * 1024))
    prefer_even = vmem_cap <= 64 * 1024 * 1024       # v7x proxy (2 TCs, 64 MiB)
    ab = jnp.dtype(_ATT_DTYPE).itemsize

    per_col1 = 4 * L * (2 * C + 4)
    per_col2 = 4 * L * (2 * C + 2 * qk_dim + 2 * qk_dim * qk_dim + 6)
    per_col3 = (4 * L * (2 * C + head_planes + 4)
                + 2 * 2 * out_planes * L * ab
                + 4 * 6 * L * L)
    per_col4 = 2 * 2 * out_planes * L * ab + 2 * out_planes * L * 4
    bb1 = _pick_block_b(B_pad, per_col1, budget, prefer_even)
    bb2 = _pick_block_b(B_pad, per_col2, budget, prefer_even)
    bb3 = _pick_block_b(B_pad, per_col3, budget, prefer_even)
    bb4 = _pick_block_b(B_pad, per_col4, budget, prefer_even)

    cp = pltpu.CompilerParams(dimension_semantics=("parallel",),
                              vmem_limit_bytes=vmem_limit)
    smem = pl.BlockSpec(memory_space=pltpu.MemorySpace.SMEM)

    def x_spec(bb):
        return pl.BlockSpec((C, L, bb), lambda i: (0, 0, i))

    # ---- pass 1: BN1 (to_qkv: conv1x1 -> ReLU -> BatchNorm1d) statistics ----
    nb1 = B_pad // bb1
    stats1 = pl.pallas_call(
        functools.partial(_bn1_stats_kernel, C=C, O=O),
        out_shape=jax.ShapeDtypeStruct((nb1, 2, O), jnp.float32),
        grid=(nb1,),
        in_specs=[x_spec(bb1), smem],
        out_specs=pl.BlockSpec((1, 2, O), lambda i: (i, 0, 0)),
        compiler_params=cp,
    )(x_clb, conv_w)
    s1, t1 = _bn_scale_shift(stats1, B * L, params['bn1_w'], params['bn1_b'])

    # fold gate_v into the BN1 affine of the value channels (exact algebra)
    is_v_chan = (jnp.arange(O) % head_planes) >= 2 * qk_dim
    gv = jnp.where(is_v_chan, params['gate_v'][0], 1.0).astype(jnp.float32)
    s1g, t1g = s1 * gv, t1 * gv

    # ---- pass 2: norm_attention batch statistics (analytic) ------------------
    nb2 = B_pad // bb2
    statsA = pl.pallas_call(
        functools.partial(_score_stats_kernel, C=C, head_dim=HD,
                          qk_dim=qk_dim, v_dim=v_dim, block_b=bb2,
                          b_true=B, padded=padded),
        out_shape=jax.ShapeDtypeStruct((nb2, 2, 3 * HD), jnp.float32),
        grid=(nb2,),
        in_specs=[x_spec(bb2),
                  pl.BlockSpec((K_aux, L, 1), lambda i: (0, 0, 0)),
                  smem, smem, smem],
        out_specs=pl.BlockSpec((1, 2, 3 * HD), lambda i: (i, 0, 0)),
        compiler_params=cp,
    )(x_clb, pos_aux, conv_w, s1, t1)
    sa, ta = _bn_scale_shift(statsA, B * L * L, params['bnA_w'], params['bnA_b'])

    # ---- pass 3: attention + value aggregation + norm_v statistics ----------
    nb3 = B_pad // bb3
    att_raw, statsV = pl.pallas_call(
        functools.partial(_attention_kernel, C=C, head_dim=HD,
                          qk_dim=qk_dim, v_dim=v_dim, block_b=bb3,
                          b_true=B, padded=padded),
        out_shape=(jax.ShapeDtypeStruct((2 * out_planes, L, B_pad), _ATT_DTYPE),
                   jax.ShapeDtypeStruct((nb3, 2, 2 * HD), jnp.float32)),
        grid=(nb3,),
        in_specs=[x_spec(bb3),
                  pl.BlockSpec((head_planes, L, L), lambda i: (0, 0, 0)),
                  smem, smem, smem, smem, smem],
        out_specs=(pl.BlockSpec((2 * out_planes, L, bb3), lambda i: (0, 0, i)),
                   pl.BlockSpec((1, 2, 2 * HD), lambda i: (i, 0, 0))),
        compiler_params=cp,
    )(x_clb, pos_g, conv_w, s1g, t1g, sa, ta)
    sv, tv = _bn_scale_shift(statsV, B * v_dim * L,
                             params['bnV_w'], params['bnV_b'])

    # ---- pass 4: norm_v affine + sum of the two value branches --------------
    nb4 = B_pad // bb4
    out_clb = pl.pallas_call(
        functools.partial(_output_kernel, head_dim=HD, v_dim=v_dim),
        out_shape=jax.ShapeDtypeStruct((out_planes, L, B_pad), jnp.float32),
        grid=(nb4,),
        in_specs=[pl.BlockSpec((2 * out_planes, L, bb4), lambda i: (0, 0, i)),
                  smem, smem],
        out_specs=pl.BlockSpec((out_planes, L, bb4), lambda i: (0, 0, i)),
        compiler_params=cp,
    )(att_raw, sv, tv)

    out_clb = out_clb[:, :, :B]          # drop lane padding
    if h_w.upper() == 'H':
        out = out_clb.reshape(out_planes, h, b, w)
        return jnp.transpose(out, (2, 0, 1, 3))     # (b, out_planes, h, w)
    else:
        out = out_clb.reshape(out_planes, w, b, h)
        return jnp.transpose(out, (2, 0, 3, 1))     # (b, out_planes, h, w)


if __name__ == "__main__":
    # Module config consistent with the PyTorch __init__:
    #   in_planes=4, out_planes=8, head_dim=2, pos_dim=16, h_w='h'
    in_planes, out_planes, head_dim, pos_dim = 4, 8, 2, 16
    b, h, w = 2, 16, 16
    O = out_planes * 2                       # conv output channels = 16
    head_planes = O // head_dim              # 8

    key = jax.random.PRNGKey(0)
    k_x, k_w, k_pos = jax.random.split(key, 3)

    x = jax.random.normal(k_x, (b, in_planes, h, w), dtype=jnp.float32)

    params = {
        # Conv1d(in_planes, 2*out_planes, k=1, bias=False) weight squeezed to (O, C)
        'conv_w': jax.random.normal(k_w, (O, in_planes), dtype=jnp.float32)
                  * (1.0 / math.sqrt(in_planes)),
        # pos_relative ~ Normal(0, 1/sqrt(in_planes)), shape (head_planes, 2*pos_dim-1)
        'pos_relative': jax.random.normal(k_pos, (head_planes, 2 * pos_dim - 1),
                                          dtype=jnp.float32)
                        * (1.0 / math.sqrt(in_planes)),
        'gate_qr': jnp.array([0.1], dtype=jnp.float32),
        'gate_kr': jnp.array([0.1], dtype=jnp.float32),
        'gate_v_pos': jnp.array([0.1], dtype=jnp.float32),
        'gate_v': jnp.array([1.0], dtype=jnp.float32),
        # BatchNorm affine params (default init: weight=1, bias=0)
        'bn1_w': jnp.ones((O,), jnp.float32),
        'bn1_b': jnp.zeros((O,), jnp.float32),
        'bnA_w': jnp.ones((3 * head_dim,), jnp.float32),
        'bnA_b': jnp.zeros((3 * head_dim,), jnp.float32),
        'bnV_w': jnp.ones((2 * head_dim,), jnp.float32),
        'bnV_b': jnp.zeros((2 * head_dim,), jnp.float32),
    }

    out = gated_axial_attention_block(x, params, head_dim=head_dim,
                                      pos_dim=pos_dim, h_w='h')
    out = jax.block_until_ready(out)
    assert out.shape == (b, out_planes, h, w), out.shape
    assert bool(jnp.all(jnp.isfinite(out)))
    print("KERNEL_OK")
</pallas_src>

<mosaic_0001>
module attributes {stable_mosaic.version = 11 : i64} {
  func.func @_bn1_stats_kernel(%arg0: i32, %arg1: memref<4x16x128xf32, #tpu.memory_space<vmem>>, %arg2: memref<16x4xf32, #tpu.memory_space<smem>>, %arg3: memref<1x2x16xf32, #tpu.memory_space<vmem>>) attributes {dimension_semantics = [#tpu.dimension_semantics<parallel>], iteration_bounds = array<i64: 1>, scalar_prefetch = 0 : i64, scratch_operands = 0 : i64, tpu.core_type = #tpu.core_type<tc>, window_params = [{transform_indices = @transform_0, window_bounds = array<i64: 4, 16, 128>}, {transform_indices = @transform_1, window_bounds = array<i64: 16, 4>}, {transform_indices = @transform_2, window_bounds = array<i64: 1, 2, 16>}]} {
    %c0 = arith.constant 0 : index
    %c0_0 = arith.constant 0 : index
    %0 = memref.load %arg2[%c0, %c0_0] : memref<16x4xf32, #tpu.memory_space<smem>>
    %c0_1 = arith.constant 0 : index
    %c0_2 = arith.constant 0 : index
    %c0_3 = arith.constant 0 : index
    %1 = vector.load %arg1[%c0_1, %c0_2, %c0_3] : memref<4x16x128xf32, #tpu.memory_space<vmem>>, vector<1x16x128xf32>
    %2 = vector.shape_cast %1 : vector<1x16x128xf32> to vector<16x128xf32>
    %3 = vector.broadcast %0 : f32 to vector<16x128xf32>
    %4 = arith.mulf %3, %2 : vector<16x128xf32>
    %c0_4 = arith.constant 0 : index
    %c1 = arith.constant 1 : index
    %5 = memref.load %arg2[%c0_4, %c1] : memref<16x4xf32, #tpu.memory_space<smem>>
    %c1_5 = arith.constant 1 : index
    %c0_6 = arith.constant 0 : index
    %c0_7 = arith.constant 0 : index
    %6 = vector.load %arg1[%c1_5, %c0_6, %c0_7] : memref<4x16x128xf32, #tpu.memory_space<vmem>>, vector<1x16x128xf32>
    %7 = vector.shape_cast %6 : vector<1x16x128xf32> to vector<16x128xf32>
    %8 = vector.broadcast %5 : f32 to vector<16x128xf32>
    %9 = arith.mulf %8, %7 : vector<16x128xf32>
    %10 = arith.addf %4, %9 : vector<16x128xf32>
    %c0_8 = arith.constant 0 : index
    %c2 = arith.constant 2 : index
    %11 = memref.load %arg2[%c0_8, %c2] : memref<16x4xf32, #tpu.memory_space<smem>>
    %c2_9 = arith.constant 2 : index
    %c0_10 = arith.constant 0 : index
    %c0_11 = arith.constant 0 : index
    %12 = vector.load %arg1[%c2_9, %c0_10, %c0_11] : memref<4x16x128xf32, #tpu.memory_space<vmem>>, vector<1x16x128xf32>
    %13 = vector.shape_cast %12 : vector<1x16x128xf32> to vector<16x128xf32>
    %14 = vector.broadcast %11 : f32 to vector<16x128xf32>
    %15 = arith.mulf %14, %13 : vector<16x128xf32>
    %16 = arith.addf %10, %15 : vector<16x128xf32>
    %c0_12 = arith.constant 0 : index
    %c3 = arith.constant 3 : index
    %17 = memref.load %arg2[%c0_12, %c3] : memref<16x4xf32, #tpu.memory_space<smem>>
    %c3_13 = arith.constant 3 : index
    %c0_14 = arith.constant 0 : index
    %c0_15 = arith.constant 0 : index
    %18 = vector.load %arg1[%c3_13, %c0_14, %c0_15] : memref<4x16x128xf32, #tpu.memory_space<vmem>>, vector<1x16x128xf32>
    %19 = vector.shape_cast %18 : vector<1x16x128xf32> to vector<16x128xf32>
    %20 = vector.broadcast %17 : f32 to vector<16x128xf32>
    %21 = arith.mulf %20, %19 : vector<16x128xf32>
    %22 = arith.addf %16, %21 : vector<16x128xf32>
    %cst = arith.constant 0.000000e+00 : f32
    %23 = vector.broadcast %cst : f32 to vector<16x128xf32>
    %24 = arith.maximumf %22, %23 : vector<16x128xf32>
    %25 = vector.shape_cast %24 : vector<16x128xf32> to vector<1x16x128xf32>
    %cst_16 = arith.constant dense<0.000000e+00> : vector<1xf32>
    %26 = vector.multi_reduction <add>, %25, %cst_16 [1, 2] : vector<1x16x128xf32> to vector<1xf32>
    %27 = vector.shape_cast %26 : vector<1xf32> to vector<1x1x1xf32>
    %28 = vector.extract %27[0, 0, 0] : f32 from vector<1x1x1xf32>
    %29 = vector.broadcast %28 : f32 to vector<1x1xf32>
    %30 = arith.mulf %24, %24 : vector<16x128xf32>
    %31 = vector.shape_cast %30 : vector<16x128xf32> to vector<1x16x128xf32>
    %cst_17 = arith.constant dense<0.000000e+00> : vector<1xf32>
    %32 = vector.multi_reduction <add>, %31, %cst_17 [1, 2] : vector<1x16x128xf32> to vector<1xf32>
    %33 = vector.shape_cast %32 : vector<1xf32> to vector<1x1x1xf32>
    %34 = vector.extract %33[0, 0, 0] : f32 from vector<1x1x1xf32>
    %35 = vector.broadcast %34 : f32 to vector<1x1xf32>
    %c1_18 = arith.constant 1 : index
    %c0_19 = arith.constant 0 : index
    %36 = memref.load %arg2[%c1_18, %c0_19] : memref<16x4xf32, #tpu.memory_space<smem>>
    %c0_20 = arith.constant 0 : index
    %c0_21 = arith.constant 0 : index
    %c0_22 = arith.constant 0 : index
    %37 = vector.load %arg1[%c0_20, %c0_21, %c0_22] : memref<4x16x128xf32, #tpu.memory_space<vmem>>, vector<1x16x128xf32>
    %38 = vector.shape_cast %37 : vector<1x16x128xf32> to vector<16x128xf32>
    %39 = vector.broadcast %36 : f32 to vector<16x128xf32>
    %40 = arith.mulf %39, %38 : vector<16x128xf32>
    %c1_23 = arith.constant 1 : index
    %c1_24 = arith.constant 1 : index
    %41 = memref.load %arg2[%c1_23, %c1_24] : memref<16x4xf32, #tpu.memory_space<smem>>
    %c1_25 = arith.constant 1 : index
    %c0_26 = arith.constant 0 : index
    %c0_27 = arith.constant 0 : index
    %42 = vector.load %arg1[%c1_25, %c0_26, %c0_27] : memref<4x16x128xf32, #tpu.memory_space<vmem>>, vector<1x16x128xf32>
    %43 = vector.shape_cast %42 : vector<1x16x128xf32> to vector<16x128xf32>
    %44 = vector.broadcast %41 : f32 to vector<16x128xf32>
    %45 = arith.mulf %44, %43 : vector<16x128xf32>
    %46 = arith.addf %40, %45 : vector<16x128xf32>
    %c1_28 = arith.constant 1 : index
    %c2_29 = arith.constant 2 : index
    %47 = memref.load %arg2[%c1_28, %c2_29] : memref<16x4xf32, #tpu.memory_space<smem>>
    %c2_30 = arith.constant 2 : index
    %c0_31 = arith.constant 0 : index
    %c0_32 = arith.constant 0 : index
    %48 = vector.load %arg1[%c2_30, %c0_31, %c0_32] : memref<4x16x128xf32, #tpu.memory_space<vmem>>, vector<1x16x128xf32>
    %49 = vector.shape_cast %48 : vector<1x16x128xf32> to vector<16x128xf32>
    %50 = vector.broadcast %47 : f32 to vector<16x128xf32>
    %51 = arith.mulf %50, %49 : vector<16x128xf32>
    %52 = arith.addf %46, %51 : vector<16x128xf32>
    %c1_33 = arith.constant 1 : index
    %c3_34 = arith.constant 3 : index
    %53 = memref.load %arg2[%c1_33, %c3_34] : memref<16x4xf32, #tpu.memory_space<smem>>
    %c3_35 = arith.constant 3 : index
    %c0_36 = arith.constant 0 : index
    %c0_37 = arith.constant 0 : index
    %54 = vector.load %arg1[%c3_35, %c0_36, %c0_37] : memref<4x16x128xf32, #tpu.memory_space<vmem>>, vector<1x16x128xf32>
    %55 = vector.shape_cast %54 : vector<1x16x128xf32> to vector<16x128xf32>
    %56 = vector.broadcast %53 : f32 to vector<16x128xf32>
    %57 = arith.mulf %56, %55 : vector<16x128xf32>
    %58 = arith.addf %52, %57 : vector<16x128xf32>
    %cst_38 = arith.constant 0.000000e+00 : f32
    %59 = vector.broadcast %cst_38 : f32 to vector<16x128xf32>
    %60 = arith.maximumf %58, %59 : vector<16x128xf32>
    %61 = vector.shape_cast %60 : vector<16x128xf32> to vector<1x16x128xf32>
    %cst_39 = arith.constant dense<0.000000e+00> : vector<1xf32>
    %62 = vector.multi_reduction <add>, %61, %cst_39 [1, 2] : vector<1x16x128xf32> to vector<1xf32>
    %63 = vector.shape_cast %62 : vector<1xf32> to vector<1x1x1xf32>
    %64 = vector.extract %63[0, 0, 0] : f32 from vector<1x1x1xf32>
    %65 = vector.broadcast %64 : f32 to vector<1x1xf32>
    %66 = arith.mulf %60, %60 : vector<16x128xf32>
    %67 = vector.shape_cast %66 : vector<16x128xf32> to vector<1x16x128xf32>
    %cst_40 = arith.constant dense<0.000000e+00> : vector<1xf32>
    %68 = vector.multi_reduction <add>, %67, %cst_40 [1, 2] : vector<1x16x128xf32> to vector<1xf32>
    %69 = vector.shape_cast %68 : vector<1xf32> to vector<1x1x1xf32>
    %70 = vector.extract %69[0, 0, 0] : f32 from vector<1x1x1xf32>
    %71 = vector.broadcast %70 : f32 to vector<1x1xf32>
    %c2_41 = arith.constant 2 : index
    %c0_42 = arith.constant 0 : index
    %72 = memref.load %arg2[%c2_41, %c0_42] : memref<16x4xf32, #tpu.memory_space<smem>>
    %c0_43 = arith.constant 0 : index
    %c0_44 = arith.constant 0 : index
    %c0_45 = arith.constant 0 : index
    %73 = vector.load %arg1[%c0_43, %c0_44, %c0_45] : memref<4x16x128xf32, #tpu.memory_space<vmem>>, vector<1x16x128xf32>
    %74 = vector.shape_cast %73 : vector<1x16x128xf32> to vector<16x128xf32>
    %75 = vector.broadcast %72 : f32 to vector<16x128xf32>
    %76 = arith.mulf %75, %74 : vector<16x128xf32>
    %c2_46 = arith.constant 2 : index
    %c1_47 = arith.constant 1 : index
    %77 = memref.load %arg2[%c2_46, %c1_47] : memref<16x4xf32, #tpu.memory_space<smem>>
    %c1_48 = arith.constant 1 : index
    %c0_49 = arith.constant 0 : index
    %c0_50 = arith.constant 0 : index
    %78 = vector.load %arg1[%c1_48, %c0_49, %c0_50] : memref<4x16x128xf32, #tpu.memory_space<vmem>>, vector<1x16x128xf32>
    %79 = vector.shape_cast %78 : vector<1x16x128xf32> to vector<16x128xf32>
    %80 = vector.broadcast %77 : f32 to vector<16x128xf32>
    %81 = arith.mulf %80, %79 : vector<16x128xf32>
    %82 = arith.addf %76, %81 : vector<16x128xf32>
    %c2_51 = arith.constant 2 : index
    %c2_52 = arith.constant 2 : index
    %83 = memref.load %arg2[%c2_51, %c2_52] : memref<16x4xf32, #tpu.memory_space<smem>>
    %c2_53 = arith.constant 2 : index
    %c0_54 = arith.constant 0 : index
    %c0_55 = arith.constant 0 : index
    %84 = vector.load %arg1[%c2_53, %c0_54, %c0_55] : memref<4x16x128xf32, #tpu.memory_space<vmem>>, vector<1x16x128xf32>
    %85 = vector.shape_cast %84 : vector<1x16x128xf32> to vector<16x128xf32>
    %86 = vector.broadcast %83 : f32 to vector<16x128xf32>
    %87 = arith.mulf %86, %85 : vector<16x128xf32>
    %88 = arith.addf %82, %87 : vector<16x128xf32>
    %c2_56 = arith.constant 2 : index
    %c3_57 = arith.constant 3 : index
    %89 = memref.load %arg2[%c2_56, %c3_57] : memref<16x4xf32, #tpu.memory_space<smem>>
    %c3_58 = arith.constant 3 : index
    %c0_59 = arith.constant 0 : index
    %c0_60 = arith.constant 0 : index
    %90 = vector.load %arg1[%c3_58, %c0_59, %c0_60] : memref<4x16x128xf32, #tpu.memory_space<vmem>>, vector<1x16x128xf32>
    %91 = vector.shape_cast %90 : vector<1x16x128xf32> to vector<16x128xf32>
    %92 = vector.broadcast %89 : f32 to vector<16x128xf32>
    %93 = arith.mulf %92, %91 : vector<16x128xf32>
    %94 = arith.addf %88, %93 : vector<16x128xf32>
    %cst_61 = arith.constant 0.000000e+00 : f32
    %95 = vector.broadcast %cst_61 : f32 to vector<16x128xf32>
    %96 = arith.maximumf %94, %95 : vector<16x128xf32>
    %97 = vector.shape_cast %96 : vector<16x128xf32> to vector<1x16x128xf32>
    %cst_62 = arith.constant dense<0.000000e+00> : vector<1xf32>
    %98 = vector.multi_reduction <add>, %97, %cst_62 [1, 2] : vector<1x16x128xf32> to vector<1xf32>
    %99 = vector.shape_cast %98 : vector<1xf32> to vector<1x1x1xf32>
    %100 = vector.extract %99[0, 0, 0] : f32 from vector<1x1x1xf32>
    %101 = vector.broadcast %100 : f32 to vector<1x1xf32>
    %102 = arith.mulf %96, %96 : vector<16x128xf32>
    %103 = vector.shape_cast %102 : vector<16x128xf32> to vector<1x16x128xf32>
    %cst_63 = arith.constant dense<0.000000e+00> : vector<1xf32>
    %104 = vector.multi_reduction <add>, %103, %cst_63 [1, 2] : vector<1x16x128xf32> to vector<1xf32>
    %105 = vector.shape_cast %104 : vector<1xf32> to vector<1x1x1xf32>
    %106 = vector.extract %105[0, 0, 0] : f32 from vector<1x1x1xf32>
    %107 = vector.broadcast %106 : f32 to vector<1x1xf32>
    %c3_64 = arith.constant 3 : index
    %c0_65 = arith.constant 0 : index
    %108 = memref.load %arg2[%c3_64, %c0_65] : memref<16x4xf32, #tpu.memory_space<smem>>
    %c0_66 = arith.constant 0 : index
    %c0_67 = arith.constant 0 : index
    %c0_68 = arith.constant 0 : index
    %109 = vector.load %arg1[%c0_66, %c0_67, %c0_68] : memref<4x16x128xf32, #tpu.memory_space<vmem>>, vector<1x16x128xf32>
    %110 = vector.shape_cast %109 : vector<1x16x128xf32> to vector<16x128xf32>
    %111 = vector.broadcast %108 : f32 to vector<16x128xf32>
    %112 = arith.mulf %111, %110 : vector<16x128xf32>
    %c3_69 = arith.constant 3 : index
    %c1_70 = arith.constant 1 : index
    %113 = memref.load %arg2[%c3_69, %c1_70] : memref<16x4xf32, #tpu.memory_space<smem>>
    %c1_71 = arith.constant 1 : index
    %c0_72 = arith.constant 0 : index
    %c0_73 = arith.constant 0 : index
    %114 = vector.load %arg1[%c1_71, %c0_72, %c0_73] : memref<4x16x128xf32, #tpu.memory_space<vmem>>, vector<1x16x128xf32>
    %115 = vector.shape_cast %114 : vector<1x16x128xf32> to vector<16x128xf32>
    %116 = vector.broadcast %113 : f32 to vector<16x128xf32>
    %117 = arith.mulf %116, %115 : vector<16x128xf32>
    %118 = arith.addf %112, %117 : vector<16x128xf32>
    %c3_74 = arith.constant 3 : index
    %c2_75 = arith.constant 2 : index
    %119 = memref.load %arg2[%c3_74, %c2_75] : memref<16x4xf32, #tpu.memory_space<smem>>
    %c2_76 = arith.constant 2 : index
    %c0_77 = arith.constant 0 : index
    %c0_78 = arith.constant 0 : index
    %120 = vector.load %arg1[%c2_76, %c0_77, %c0_78] : memref<4x16x128xf32, #tpu.memory_space<vmem>>, vector<1x16x128xf32>
    %121 = vector.shape_cast %120 : vector<1x16x128xf32> to vector<16x128xf32>
    %122 = vector.broadcast %119 : f32 to vector<16x128xf32>
    %123 = arith.mulf %122, %121 : vector<16x128xf32>
    %124 = arith.addf %118, %123 : vector<16x128xf32>
    %c3_79 = arith.constant 3 : index
    %c3_80 = arith.constant 3 : index
    %125 = memref.load %arg2[%c3_79, %c3_80] : memref<16x4xf32, #tpu.memory_space<smem>>
    %c3_81 = arith.constant 3 : index
    %c0_82 = arith.constant 0 : index
    %c0_83 = arith.constant 0 : index
    %126 = vector.load %arg1[%c3_81, %c0_82, %c0_83] : memref<4x16x128xf32, #tpu.memory_space<vmem>>, vector<1x16x128xf32>
    %127 = vector.shape_cast %126 : vector<1x16x128xf32> to vector<16x128xf32>
    %128 = vector.broadcast %125 : f32 to vector<16x128xf32>
    %129 = arith.mulf %128, %127 : vector<16x128xf32>
    %130 = arith.addf %124, %129 : vector<16x128xf32>
    %cst_84 = arith.constant 0.000000e+00 : f32
    %131 = vector.broadcast %cst_84 : f32 to vector<16x128xf32>
    %132 = arith.maximumf %130, %131 : vector<16x128xf32>
    %133 = vector.shape_cast %132 : vector<16x128xf32> to vector<1x16x128xf32>
    %cst_85 = arith.constant dense<0.000000e+00> : vector<1xf32>
    %134 = vector.multi_reduction <add>, %133, %cst_85 [1, 2] : vector<1x16x128xf32> to vector<1xf32>
    %135 = vector.shape_cast %134 : vector<1xf32> to vector<1x1x1xf32>
    %136 = vector.extract %135[0, 0, 0] : f32 from vector<1x1x1xf32>
    %137 = vector.broadcast %136 : f32 to vector<1x1xf32>
    %138 = arith.mulf %132, %132 : vector<16x128xf32>
    %139 = vector.shape_cast %138 : vector<16x128xf32> to vector<1x16x128xf32>
    %cst_86 = arith.constant dense<0.000000e+00> : vector<1xf32>
    %140 = vector.multi_reduction <add>, %139, %cst_86 [1, 2] : vector<1x16x128xf32> to vector<1xf32>
    %141 = vector.shape_cast %140 : vector<1xf32> to vector<1x1x1xf32>
    %142 = vector.extract %141[0, 0, 0] : f32 from vector<1x1x1xf32>
    %143 = vector.broadcast %142 : f32 to vector<1x1xf32>
    %c4 = arith.constant 4 : index
    %c0_87 = arith.constant 0 : index
    %144 = memref.load %arg2[%c4, %c0_87] : memref<16x4xf32, #tpu.memory_space<smem>>
    %c0_88 = arith.constant 0 : index
    %c0_89 = arith.constant 0 : index
    %c0_90 = arith.constant 0 : index
    %145 = vector.load %arg1[%c0_88, %c0_89, %c0_90] : memref<4x16x128xf32, #tpu.memory_space<vmem>>, vector<1x16x128xf32>
    %146 = vector.shape_cast %145 : vector<1x16x128xf32> to vector<16x128xf32>
    %147 = vector.broadcast %144 : f32 to vector<16x128xf32>
    %148 = arith.mulf %147, %146 : vector<16x128xf32>
    %c4_91 = arith.constant 4 : index
    %c1_92 = arith.constant 1 : index
    %149 = memref.load %arg2[%c4_91, %c1_92] : memref<16x4xf32, #tpu.memory_space<smem>>
    %c1_93 = arith.constant 1 : index
    %c0_94 = arith.constant 0 : index
    %c0_95 = arith.constant 0 : index
    %150 = vector.load %arg1[%c1_93, %c0_94, %c0_95] : memref<4x16x128xf32, #tpu.memory_space<vmem>>, vector<1x16x128xf32>
    %151 = vector.shape_cast %150 : vector<1x16x128xf32> to vector<16x128xf32>
    %152 = vector.broadcast %149 : f32 to vector<16x128xf32>
    %153 = arith.mulf %152, %151 : vector<16x128xf32>
    %154 = arith.addf %148, %153 : vector<16x128xf32>
    %c4_96 = arith.constant 4 : index
    %c2_97 = arith.constant 2 : index
    %155 = memref.load %arg2[%c4_96, %c2_97] : memref<16x4xf32, #tpu.memory_space<smem>>
    %c2_98 = arith.constant 2 : index
    %c0_99 = arith.constant 0 : index
    %c0_100 = arith.constant 0 : index
    %156 = vector.load %arg1[%c2_98, %c0_99, %c0_100] : memref<4x16x128xf32, #tpu.memory_space<vmem>>, vector<1x16x128xf32>
    %157 = vector.shape_cast %156 : vector<1x16x128xf32> to vector<16x128xf32>
    %158 = vector.broadcast %155 : f32 to vector<16x128xf32>
    %159 = arith.mulf %158, %157 : vector<16x128xf32>
    %160 = arith.addf %154, %159 : vector<16x128xf32>
    %c4_101 = arith.constant 4 : index
    %c3_102 = arith.constant 3 : index
    %161 = memref.load %arg2[%c4_101, %c3_102] : memref<16x4xf32, #tpu.memory_space<smem>>
    %c3_103 = arith.constant 3 : index
    %c0_104 = arith.constant 0 : index
    %c0_105 = arith.constant 0 : index
    %162 = vector.load %arg1[%c3_103, %c0_104, %c0_105] : memref<4x16x128xf32, #tpu.memory_space<vmem>>, vector<1x16x128xf32>
    %163 = vector.shape_cast %162 : vector<1x16x128xf32> to vector<16x128xf32>
    %164 = vector.broadcast %161 : f32 to vector<16x128xf32>
    %165 = arith.mulf %164, %163 : vector<16x128xf32>
    %166 = arith.addf %160, %165 : vector<16x128xf32>
    %cst_106 = arith.constant 0.000000e+00 : f32
    %167 = vector.broadcast %cst_106 : f32 to vector<16x128xf32>
    %168 = arith.maximumf %166, %167 : vector<16x128xf32>
    %169 = vector.shape_cast %168 : vector<16x128xf32> to vector<1x16x128xf32>
    %cst_107 = arith.constant dense<0.000000e+00> : vector<1xf32>
    %170 = vector.multi_reduction <add>, %169, %cst_107 [1, 2] : vector<1x16x128xf32> to vector<1xf32>
    %171 = vector.shape_cast %170 : vector<1xf32> to vector<1x1x1xf32>
    %172 = vector.extract %171[0, 0, 0] : f32 from vector<1x1x1xf32>
    %173 = vector.broadcast %172 : f32 to vector<1x1xf32>
    %174 = arith.mulf %168, %168 : vector<16x128xf32>
    %175 = vector.shape_cast %174 : vector<16x128xf32> to vector<1x16x128xf32>
    %cst_108 = arith.constant dense<0.000000e+00> : vector<1xf32>
    %176 = vector.multi_reduction <add>, %175, %cst_108 [1, 2] : vector<1x16x128xf32> to vector<1xf32>
    %177 = vector.shape_cast %176 : vector<1xf32> to vector<1x1x1xf32>
    %178 = vector.extract %177[0, 0, 0] : f32 from vector<1x1x1xf32>
    %179 = vector.broadcast %178 : f32 to vector<1x1xf32>
    %c5 = arith.constant 5 : index
    %c0_109 = arith.constant 0 : index
    %180 = memref.load %arg2[%c5, %c0_109] : memref<16x4xf32, #tpu.memory_space<smem>>
    %c0_110 = arith.constant 0 : index
    %c0_111 = arith.constant 0 : index
    %c0_112 = arith.constant 0 : index
    %181 = vector.load %arg1[%c0_110, %c0_111, %c0_112] : memref<4x16x128xf32, #tpu.memory_space<vmem>>, vector<1x16x128xf32>
    %182 = vector.shape_cast %181 : vector<1x16x128xf32> to vector<16x128xf32>
    %183 = vector.broadcast %180 : f32 to vector<16x128xf32>
    %184 = arith.mulf %183, %182 : vector<16x128xf32>
    %c5_113 = arith.constant 5 : index
    %c1_114 = arith.constant 1 : index
    %185 = memref.load %arg2[%c5_113, %c1_114] : memref<16x4xf32, #tpu.memory_space<smem>>
    %c1_115 = arith.constant 1 : index
    %c0_116 = arith.constant 0 : index
    %c0_117 = arith.constant 0 : index
    %186 = vector.load %arg1[%c1_115, %c0_116, %c0_117] : memref<4x16x128xf32, #tpu.memory_space<vmem>>, vector<1x16x128xf32>
    %187 = vector.shape_cast %186 : vector<1x16x128xf32> to vector<16x128xf32>
    %188 = vector.broadcast %185 : f32 to vector<16x128xf32>
    %189 = arith.mulf %188, %187 : vector<16x128xf32>
    %190 = arith.addf %184, %189 : vector<16x128xf32>
    %c5_118 = arith.constant 5 : index
    %c2_119 = arith.constant 2 : index
    %191 = memref.load %arg2[%c5_118, %c2_119] : memref<16x4xf32, #tpu.memory_space<smem>>
    %c2_120 = arith.constant 2 : index
    %c0_121 = arith.constant 0 : index
    %c0_122 = arith.constant 0 : index
    %192 = vector.load %arg1[%c2_120, %c0_121, %c0_122] : memref<4x16x128xf32, #tpu.memory_space<vmem>>, vector<1x16x128xf32>
    %193 = vector.shape_cast %192 : vector<1x16x128xf32> to vector<16x128xf32>
    %194 = vector.broadcast %191 : f32 to vector<16x128xf32>
    %195 = arith.mulf %194, %193 : vector<16x128xf32>
    %196 = arith.addf %190, %195 : vector<16x128xf32>
    %c5_123 = arith.constant 5 : index
    %c3_124 = arith.constant 3 : index
    %197 = memref.load %arg2[%c5_123, %c3_124] : memref<16x4xf32, #tpu.memory_space<smem>>
    %c3_125 = arith.constant 3 : index
    %c0_126 = arith.constant 0 : index
    %c0_127 = arith.constant 0 : index
    %198 = vector.load %arg1[%c3_125, %c0_126, %c0_127] : memref<4x16x128xf32, #tpu.memory_space<vmem>>, vector<1x16x128xf32>
    %199 = vector.shape_cast %198 : vector<1x16x128xf32> to vector<16x128xf32>
    %200 = vector.broadcast %197 : f32 to vector<16x128xf32>
    %201 = arith.mulf %200, %199 : vector<16x128xf32>
    %202 = arith.addf %196, %201 : vector<16x128xf32>
    %cst_128 = arith.constant 0.000000e+00 : f32
    %203 = vector.broadcast %cst_128 : f32 to vector<16x128xf32>
    %204 = arith.maximumf %202, %203 : vector<16x128xf32>
    %205 = vector.shape_cast %204 : vector<16x128xf32> to vector<1x16x128xf32>
    %cst_129 = arith.constant dense<0.000000e+00> : vector<1xf32>
    %206 = vector.multi_reduction <add>, %205, %cst_129 [1, 2] : vector<1x16x128xf32> to vector<1xf32>
    %207 = vector.shape_cast %206 : vector<1xf32> to vector<1x1x1xf32>
    %208 = vector.extract %207[0, 0, 0] : f32 from vector<1x1x1xf32>
    %209 = vector.broadcast %208 : f32 to vector<1x1xf32>
    %210 = arith.mulf %204, %204 : vector<16x128xf32>
    %211 = vector.shape_cast %210 : vector<16x128xf32> to vector<1x16x128xf32>
    %cst_130 = arith.constant dense<0.000000e+00> : vector<1xf32>
    %212 = vector.multi_reduction <add>, %211, %cst_130 [1, 2] : vector<1x16x128xf32> to vector<1xf32>
    %213 = vector.shape_cast %212 : vector<1xf32> to vector<1x1x1xf32>
    %214 = vector.extract %213[0, 0, 0] : f32 from vector<1x1x1xf32>
    %215 = vector.broadcast %214 : f32 to vector<1x1xf32>
    %c6 = arith.constant 6 : index
    %c0_131 = arith.constant 0 : index
    %216 = memref.load %arg2[%c6, %c0_131] : memref<16x4xf32, #tpu.memory_space<smem>>
    %c0_132 = arith.constant 0 : index
    %c0_133 = arith.constant 0 : index
    %c0_134 = arith.constant 0 : index
    %217 = vector.load %arg1[%c0_132, %c0_133, %c0_134] : memref<4x16x128xf32, #tpu.memory_space<vmem>>, vector<1x16x128xf32>
    %218 = vector.shape_cast %217 : vector<1x16x128xf32> to vector<16x128xf32>
    %219 = vector.broadcast %216 : f32 to vector<16x128xf32>
    %220 = arith.mulf %219, %218 : vector<16x128xf32>
    %c6_135 = arith.constant 6 : index
    %c1_136 = arith.constant 1 : index
    %221 = memref.load %arg2[%c6_135, %c1_136] : memref<16x4xf32, #tpu.memory_space<smem>>
    %c1_137 = arith.constant 1 : index
    %c0_138 = arith.constant 0 : index
    %c0_139 = arith.constant 0 : index
    %222 = vector.load %arg1[%c1_137, %c0_138, %c0_139] : memref<4x16x128xf32, #tpu.memory_space<vmem>>, vector<1x16x128xf32>
    %223 = vector.shape_cast %222 : vector<1x16x128xf32> to vector<16x128xf32>
    %224 = vector.broadcast %221 : f32 to vector<16x128xf32>
    %225 = arith.mulf %224, %223 : vector<16x128xf32>
    %226 = arith.addf %220, %225 : vector<16x128xf32>
    %c6_140 = arith.constant 6 : index
    %c2_141 = arith.constant 2 : index
    %227 = memref.load %arg2[%c6_140, %c2_141] : memref<16x4xf32, #tpu.memory_space<smem>>
    %c2_142 = arith.constant 2 : index
    %c0_143 = arith.constant 0 : index
    %c0_144 = arith.constant 0 : index
    %228 = vector.load %arg1[%c2_142, %c0_143, %c0_144] : memref<4x16x128xf32, #tpu.memory_space<vmem>>, vector<1x16x128xf32>
    %229 = vector.shape_cast %228 : vector<1x16x128xf32> to vector<16x128xf32>
    %230 = vector.broadcast %227 : f32 to vector<16x128xf32>
    %231 = arith.mulf %230, %229 : vector<16x128xf32>
    %232 = arith.addf %226, %231 : vector<16x128xf32>
    %c6_145 = arith.constant 6 : index
    %c3_146 = arith.constant 3 : index
    %233 = memref.load %arg2[%c6_145, %c3_146] : memref<16x4xf32, #tpu.memory_space<smem>>
    %c3_147 = arith.constant 3 : index
    %c0_148 = arith.constant 0 : index
    %c0_149 = arith.constant 0 : index
    %234 = vector.load %arg1[%c3_147, %c0_148, %c0_149] : memref<4x16x128xf32, #tpu.memory_space<vmem>>, vector<1x16x128xf32>
    %235 = vector.shape_cast %234 : vector<1x16x128xf32> to vector<16x128xf32>
    %236 = vector.broadcast %233 : f32 to vector<16x128xf32>
    %237 = arith.mulf %236, %235 : vector<16x128xf32>
    %238 = arith.addf %232, %237 : vector<16x128xf32>
    %cst_150 = arith.constant 0.000000e+00 : f32
    %239 = vector.broadcast %cst_150 : f32 to vector<16x128xf32>
    %240 = arith.maximumf %238, %239 : vector<16x128xf32>
    %241 = vector.shape_cast %240 : vector<16x128xf32> to vector<1x16x128xf32>
    %cst_151 = arith.constant dense<0.000000e+00> : vector<1xf32>
    %242 = vector.multi_reduction <add>, %241, %cst_151 [1, 2] : vector<1x16x128xf32> to vector<1xf32>
    %243 = vector.shape_cast %242 : vector<1xf32> to vector<1x1x1xf32>
    %244 = vector.extract %243[0, 0, 0] : f32 from vector<1x1x1xf32>
    %245 = vector.broadcast %244 : f32 to vector<1x1xf32>
    %246 = arith.mulf %240, %240 : vector<16x128xf32>
    %247 = vector.shape_cast %246 : vector<16x128xf32> to vector<1x16x128xf32>
    %cst_152 = arith.constant dense<0.000000e+00> : vector<1xf32>
    %248 = vector.multi_reduction <add>, %247, %cst_152 [1, 2] : vector<1x16x128xf32> to vector<1xf32>
    %249 = vector.shape_cast %248 : vector<1xf32> to vector<1x1x1xf32>
    %250 = vector.extract %249[0, 0, 0] : f32 from vector<1x1x1xf32>
    %251 = vector.broadcast %250 : f32 to vector<1x1xf32>
    %c7 = arith.constant 7 : index
    %c0_153 = arith.constant 0 : index
    %252 = memref.load %arg2[%c7, %c0_153] : memref<16x4xf32, #tpu.memory_space<smem>>
    %c0_154 = arith.constant 0 : index
    %c0_155 = arith.constant 0 : index
    %c0_156 = arith.constant 0 : index
    %253 = vector.load %arg1[%c0_154, %c0_155, %c0_156] : memref<4x16x128xf32, #tpu.memory_space<vmem>>, vector<1x16x128xf32>
    %254 = vector.shape_cast %253 : vector<1x16x128xf32> to vector<16x128xf32>
    %255 = vector.broadcast %252 : f32 to vector<16x128xf32>
    %256 = arith.mulf %255, %254 : vector<16x128xf32>
    %c7_157 = arith.constant 7 : index
    %c1_158 = arith.constant 1 : index
    %257 = memref.load %arg2[%c7_157, %c1_158] : memref<16x4xf32, #tpu.memory_space<smem>>
    %c1_159 = arith.constant 1 : index
    %c0_160 = arith.constant 0 : index
    %c0_161 = arith.constant 0 : index
    %258 = vector.load %arg1[%c1_159, %c0_160, %c0_161] : memref<4x16x128xf32, #tpu.memory_space<vmem>>, vector<1x16x128xf32>
    %259 = vector.shape_cast %258 : vector<1x16x128xf32> to vector<16x128xf32>
    %260 = vector.broadcast %257 : f32 to vector<16x128xf32>
    %261 = arith.mulf %260, %259 : vector<16x128xf32>
    %262 = arith.addf %256, %261 : vector<16x128xf32>
    %c7_162 = arith.constant 7 : index
    %c2_163 = arith.constant 2 : index
    %263 = memref.load %arg2[%c7_162, %c2_163] : memref<16x4xf32, #tpu.memory_space<smem>>
    %c2_164 = arith.constant 2 : index
    %c0_165 = arith.constant 0 : index
    %c0_166 = arith.constant 0 : index
    %264 = vector.load %arg1[%c2_164, %c0_165, %c0_166] : memref<4x16x128xf32, #tpu.memory_space<vmem>>, vector<1x16x128xf32>
    %265 = vector.shape_cast %264 : vector<1x16x128xf32> to vector<16x128xf32>
    %266 = vector.broadcast %263 : f32 to vector<16x128xf32>
    %267 = arith.mulf %266, %265 : vector<16x128xf32>
    %268 = arith.addf %262, %267 : vector<16x128xf32>
    %c7_167 = arith.constant 7 : index
    %c3_168 = arith.constant 3 : index
    %269 = memref.load %arg2[%c7_167, %c3_168] : memref<16x4xf32, #tpu.memory_space<smem>>
    %c3_169 = arith.constant 3 : index
    %c0_170 = arith.constant 0 : index
    %c0_171 = arith.constant 0 : index
    %270 = vector.load %arg1[%c3_169, %c0_170, %c0_171] : memref<4x16x128xf32, #tpu.memory_space<vmem>>, vector<1x16x128xf32>
    %271 = vector.shape_cast %270 : vector<1x16x128xf32> to vector<16x128xf32>
    %272 = vector.broadcast %269 : f32 to vector<16x128xf32>
    %273 = arith.mulf %272, %271 : vector<16x128xf32>
    %274 = arith.addf %268, %273 : vector<16x128xf32>
    %cst_172 = arith.constant 0.000000e+00 : f32
    %275 = vector.broadcast %cst_172 : f32 to vector<16x128xf32>
    %276 = arith.maximumf %274, %275 : vector<16x128xf32>
    %277 = vector.shape_cast %276 : vector<16x128xf32> to vector<1x16x128xf32>
    %cst_173 = arith.constant dense<0.000000e+00> : vector<1xf32>
    %278 = vector.multi_reduction <add>, %277, %cst_173 [1, 2] : vector<1x16x128xf32> to vector<1xf32>
    %279 = vector.shape_cast %278 : vector<1xf32> to vector<1x1x1xf32>
    %280 = vector.extract %279[0, 0, 0] : f32 from vector<1x1x1xf32>
    %281 = vector.broadcast %280 : f32 to vector<1x1xf32>
    %282 = arith.mulf %276, %276 : vector<16x128xf32>
    %283 = vector.shape_cast %282 : vector<16x128xf32> to vector<1x16x128xf32>
    %cst_174 = arith.constant dense<0.000000e+00> : vector<1xf32>
    %284 = vector.multi_reduction <add>, %283, %cst_174 [1, 2] : vector<1x16x128xf32> to vector<1xf32>
    %285 = vector.shape_cast %284 : vector<1xf32> to vector<1x1x1xf32>
    %286 = vector.extract %285[0, 0, 0] : f32 from vector<1x1x1xf32>
    %287 = vector.broadcast %286 : f32 to vector<1x1xf32>
    %c8 = arith.constant 8 : index
    %c0_175 = arith.constant 0 : index
    %288 = memref.load %arg2[%c8, %c0_175] : memref<16x4xf32, #tpu.memory_space<smem>>
    %c0_176 = arith.constant 0 : index
    %c0_177 = arith.constant 0 : index
    %c0_178 = arith.constant 0 : index
    %289 = vector.load %arg1[%c0_176, %c0_177, %c0_178] : memref<4x16x128xf32, #tpu.memory_space<vmem>>, vector<1x16x128xf32>
    %290 = vector.shape_cast %289 : vector<1x16x128xf32> to vector<16x128xf32>
    %291 = vector.broadcast %288 : f32 to vector<16x128xf32>
    %292 = arith.mulf %291, %290 : vector<16x128xf32>
    %c8_179 = arith.constant 8 : index
    %c1_180 = arith.constant 1 : index
    %293 = memref.load %arg2[%c8_179, %c1_180] : memref<16x4xf32, #tpu.memory_space<smem>>
    %c1_181 = arith.constant 1 : index
    %c0_182 = arith.constant 0 : index
    %c0_183 = arith.constant 0 : index
    %294 = vector.load %arg1[%c1_181, %c0_182, %c0_183] : memref<4x16x128xf32, #tpu.memory_space<vmem>>, vector<1x16x128xf32>
    %295 = vector.shape_cast %294 : vector<1x16x128xf32> to vector<16x128xf32>
    %296 = vector.broadcast %293 : f32 to vector<16x128xf32>
    %297 = arith.mulf %296, %295 : vector<16x128xf32>
    %298 = arith.addf %292, %297 : vector<16x128xf32>
    %c8_184 = arith.constant 8 : index
    %c2_185 = arith.constant 2 : index
    %299 = memref.load %arg2[%c8_184, %c2_185] : memref<16x4xf32, #tpu.memory_space<smem>>
    %c2_186 = arith.constant 2 : index
    %c0_187 = arith.constant 0 : index
    %c0_188 = arith.constant 0 : index
    %300 = vector.load %arg1[%c2_186, %c0_187, %c0_188] : memref<4x16x128xf32, #tpu.memory_space<vmem>>, vector<1x16x128xf32>
    %301 = vector.shape_cast %300 : vector<1x16x128xf32> to vector<16x128xf32>
    %302 = vector.broadcast %299 : f32 to vector<16x128xf32>
    %303 = arith.mulf %302, %301 : vector<16x128xf32>
    %304 = arith.addf %298, %303 : vector<16x128xf32>
    %c8_189 = arith.constant 8 : index
    %c3_190 = arith.constant 3 : index
    %305 = memref.load %arg2[%c8_189, %c3_190] : memref<16x4xf32, #tpu.memory_space<smem>>
    %c3_191 = arith.constant 3 : index
    %c0_192 = arith.constant 0 : index
    %c0_193 = arith.constant 0 : index
    %306 = vector.load %arg1[%c3_191, %c0_192, %c0_193] : memref<4x16x128xf32, #tpu.memory_space<vmem>>, vector<1x16x128xf32>
    %307 = vector.shape_cast %306 : vector<1x16x128xf32> to vector<16x128xf32>
    %308 = vector.broadcast %305 : f32 to vector<16x128xf32>
    %309 = arith.mulf %308, %307 : vector<16x128xf32>
    %310 = arith.addf %304, %309 : vector<16x128xf32>
    %cst_194 = arith.constant 0.000000e+00 : f32
    %311 = vector.broadcast %cst_194 : f32 to vector<16x128xf32>
    %312 = arith.maximumf %310, %311 : vector<16x128xf32>
    %313 = vector.shape_cast %312 : vector<16x128xf32> to vector<1x16x128xf32>
    %cst_195 = arith.constant dense<0.000000e+00> : vector<1xf32>
    %314 = vector.multi_reduction <add>, %313, %cst_195 [1, 2] : vector<1x16x128xf32> to vector<1xf32>
    %315 = vector.shape_cast %314 : vector<1xf32> to vector<1x1x1xf32>
    %316 = vector.extract %315[0, 0, 0] : f32 from vector<1x1x1xf32>
    %317 = vector.broadcast %316 : f32 to vector<1x1xf32>
    %318 = arith.mulf %312, %312 : vector<16x128xf32>
    %319 = vector.shape_cast %318 : vector<16x128xf32> to vector<1x16x128xf32>
    %cst_196 = arith.constant dense<0.000000e+00> : vector<1xf32>
    %320 = vector.multi_reduction <add>, %319, %cst_196 [1, 2] : vector<1x16x128xf32> to vector<1xf32>
    %321 = vector.shape_cast %320 : vector<1xf32> to vector<1x1x1xf32>
    %322 = vector.extract %321[0, 0, 0] : f32 from vector<1x1x1xf32>
    %323 = vector.broadcast %322 : f32 to vector<1x1xf32>
    %c9 = arith.constant 9 : index
    %c0_197 = arith.constant 0 : index
    %324 = memref.load %arg2[%c9, %c0_197] : memref<16x4xf32, #tpu.memory_space<smem>>
    %c0_198 = arith.constant 0 : index
    %c0_199 = arith.constant 0 : index
    %c0_200 = arith.constant 0 : index
    %325 = vector.load %arg1[%c0_198, %c0_199, %c0_200] : memref<4x16x128xf32, #tpu.memory_space<vmem>>, vector<1x16x128xf32>
    %326 = vector.shape_cast %325 : vector<1x16x128xf32> to vector<16x128xf32>
    %327 = vector.broadcast %324 : f32 to vector<16x128xf32>
    %328 = arith.mulf %327, %326 : vector<16x128xf32>
    %c9_201 = arith.constant 9 : index
    %c1_202 = arith.constant 1 : index
    %329 = memref.load %arg2[%c9_201, %c1_202] : memref<16x4xf32, #tpu.memory_space<smem>>
    %c1_203 = arith.constant 1 : index
    %c0_204 = arith.constant 0 : index
    %c0_205 = arith.constant 0 : index
    %330 = vector.load %arg1[%c1_203, %c0_204, %c0_205] : memref<4x16x128xf32, #tpu.memory_space<vmem>>, vector<1x16x128xf32>
    %331 = vector.shape_cast %330 : vector<1x16x128xf32> to vector<16x128xf32>
    %332 = vector.broadcast %329 : f32 to vector<16x128xf32>
    %333 = arith.mulf %332, %331 : vector<16x128xf32>
    %334 = arith.addf %328, %333 : vector<16x128xf32>
    %c9_206 = arith.constant 9 : index
    %c2_207 = arith.constant 2 : index
    %335 = memref.load %arg2[%c9_206, %c2_207] : memref<16x4xf32, #tpu.memory_space<smem>>
    %c2_208 = arith.constant 2 : index
    %c0_209 = arith.constant 0 : index
    %c0_210 = arith.constant 0 : index
    %336 = vector.load %arg1[%c2_208, %c0_209, %c0_210] : memref<4x16x128xf32, #tpu.memory_space<vmem>>, vector<1x16x128xf32>
    %337 = vector.shape_cast %336 : vector<1x16x128xf32> to vector<16x128xf32>
    %338 = vector.broadcast %335 : f32 to vector<16x128xf32>
    %339 = arith.mulf %338, %337 : vector<16x128xf32>
    %340 = arith.addf %334, %339 : vector<16x128xf32>
    %c9_211 = arith.constant 9 : index
    %c3_212 = arith.constant 3 : index
    %341 = memref.load %arg2[%c9_211, %c3_212] : memref<16x4xf32, #tpu.memory_space<smem>>
    %c3_213 = arith.constant 3 : index
    %c0_214 = arith.constant 0 : index
    %c0_215 = arith.constant 0 : index
    %342 = vector.load %arg1[%c3_213, %c0_214, %c0_215] : memref<4x16x128xf32, #tpu.memory_space<vmem>>, vector<1x16x128xf32>
    %343 = vector.shape_cast %342 : vector<1x16x128xf32> to vector<16x128xf32>
    %344 = vector.broadcast %341 : f32 to vector<16x128xf32>
    %345 = arith.mulf %344, %343 : vector<16x128xf32>
    %346 = arith.addf %340, %345 : vector<16x128xf32>
    %cst_216 = arith.constant 0.000000e+00 : f32
    %347 = vector.broadcast %cst_216 : f32 to vector<16x128xf32>
    %348 = arith.maximumf %346, %347 : vector<16x128xf32>
    %349 = vector.shape_cast %348 : vector<16x128xf32> to vector<1x16x128xf32>
    %cst_217 = arith.constant dense<0.000000e+00> : vector<1xf32>
    %350 = vector.multi_reduction <add>, %349, %cst_217 [1, 2] : vector<1x16x128xf32> to vector<1xf32>
    %351 = vector.shape_cast %350 : vector<1xf32> to vector<1x1x1xf32>
    %352 = vector.extract %351[0, 0, 0] : f32 from vector<1x1x1xf32>
    %353 = vector.broadcast %352 : f32 to vector<1x1xf32>
    %354 = arith.mulf %348, %348 : vector<16x128xf32>
    %355 = vector.shape_cast %354 : vector<16x128xf32> to vector<1x16x128xf32>
    %cst_218 = arith.constant dense<0.000000e+00> : vector<1xf32>
    %356 = vector.multi_reduction <add>, %355, %cst_218 [1, 2] : vector<1x16x128xf32> to vector<1xf32>
    %357 = vector.shape_cast %356 : vector<1xf32> to vector<1x1x1xf32>
    %358 = vector.extract %357[0, 0, 0] : f32 from vector<1x1x1xf32>
    %359 = vector.broadcast %358 : f32 to vector<1x1xf32>
    %c10 = arith.constant 10 : index
    %c0_219 = arith.constant 0 : index
    %360 = memref.load %arg2[%c10, %c0_219] : memref<16x4xf32, #tpu.memory_space<smem>>
    %c0_220 = arith.constant 0 : index
    %c0_221 = arith.constant 0 : index
    %c0_222 = arith.constant 0 : index
    %361 = vector.load %arg1[%c0_220, %c0_221, %c0_222] : memref<4x16x128xf32, #tpu.memory_space<vmem>>, vector<1x16x128xf32>
    %362 = vector.shape_cast %361 : vector<1x16x128xf32> to vector<16x128xf32>
    %363 = vector.broadcast %360 : f32 to vector<16x128xf32>
    %364 = arith.mulf %363, %362 : vector<16x128xf32>
    %c10_223 = arith.constant 10 : index
    %c1_224 = arith.constant 1 : index
    %365 = memref.load %arg2[%c10_223, %c1_224] : memref<16x4xf32, #tpu.memory_space<smem>>
    %c1_225 = arith.constant 1 : index
    %c0_226 = arith.constant 0 : index
    %c0_227 = arith.constant 0 : index
    %366 = vector.load %arg1[%c1_225, %c0_226, %c0_227] : memref<4x16x128xf32, #tpu.memory_space<vmem>>, vector<1x16x128xf32>
    %367 = vector.shape_cast %366 : vector<1x16x128xf32> to vector<16x128xf32>
    %368 = vector.broadcast %365 : f32 to vector<16x128xf32>
    %369 = arith.mulf %368, %367 : vector<16x128xf32>
    %370 = arith.addf %364, %369 : vector<16x128xf32>
    %c10_228 = arith.constant 10 : index
    %c2_229 = arith.constant 2 : index
    %371 = memref.load %arg2[%c10_228, %c2_229] : memref<16x4xf32, #tpu.memory_space<smem>>
    %c2_230 = arith.constant 2 : index
    %c0_231 = arith.constant 0 : index
    %c0_232 = arith.constant 0 : index
    %372 = vector.load %arg1[%c2_230, %c0_231, %c0_232] : memref<4x16x128xf32, #tpu.memory_space<vmem>>, vector<1x16x128xf32>
    %373 = vector.shape_cast %372 : vector<1x16x128xf32> to vector<16x128xf32>
    %374 = vector.broadcast %371 : f32 to vector<16x128xf32>
    %375 = arith.mulf %374, %373 : vector<16x128xf32>
    %376 = arith.addf %370, %375 : vector<16x128xf32>
    %c10_233 = arith.constant 10 : index
    %c3_234 = arith.constant 3 : index
    %377 = memref.load %arg2[%c10_233, %c3_234] : memref<16x4xf32, #tpu.memory_space<smem>>
    %c3_235 = arith.constant 3 : index
    %c0_236 = arith.constant 0 : index
    %c0_237 = arith.constant 0 : index
    %378 = vector.load %arg1[%c3_235, %c0_236, %c0_237] : memref<4x16x128xf32, #tpu.memory_space<vmem>>, vector<1x16x128xf32>
    %379 = vector.shape_cast %378 : vector<1x16x128xf32> to vector<16x128xf32>
    %380 = vector.broadcast %377 : f32 to vector<16x128xf32>
    %381 = arith.mulf %380, %379 : vector<16x128xf32>
    %382 = arith.addf %376, %381 : vector<16x128xf32>
    %cst_238 = arith.constant 0.000000e+00 : f32
    %383 = vector.broadcast %cst_238 : f32 to vector<16x128xf32>
    %384 = arith.maximumf %382, %383 : vector<16x128xf32>
    %385 = vector.shape_cast %384 : vector<16x128xf32> to vector<1x16x128xf32>
    %cst_239 = arith.constant dense<0.000000e+00> : vector<1xf32>
    %386 = vector.multi_reduction <add>, %385, %cst_239 [1, 2] : vector<1x16x128xf32> to vector<1xf32>
    %387 = vector.shape_cast %386 : vector<1xf32> to vector<1x1x1xf32>
    %388 = vector.extract %387[0, 0, 0] : f32 from vector<1x1x1xf32>
    %389 = vector.broadcast %388 : f32 to vector<1x1xf32>
    %390 = arith.mulf %384, %384 : vector<16x128xf32>
    %391 = vector.shape_cast %390 : vector<16x128xf32> to vector<1x16x128xf32>
    %cst_240 = arith.constant dense<0.000000e+00> : vector<1xf32>
    %392 = vector.multi_reduction <add>, %391, %cst_240 [1, 2] : vector<1x16x128xf32> to vector<1xf32>
    %393 = vector.shape_cast %392 : vector<1xf32> to vector<1x1x1xf32>
    %394 = vector.extract %393[0, 0, 0] : f32 from vector<1x1x1xf32>
    %395 = vector.broadcast %394 : f32 to vector<1x1xf32>
    %c11 = arith.constant 11 : index
    %c0_241 = arith.constant 0 : index
    %396 = memref.load %arg2[%c11, %c0_241] : memref<16x4xf32, #tpu.memory_space<smem>>
    %c0_242 = arith.constant 0 : index
    %c0_243 = arith.constant 0 : index
    %c0_244 = arith.constant 0 : index
    %397 = vector.load %arg1[%c0_242, %c0_243, %c0_244] : memref<4x16x128xf32, #tpu.memory_space<vmem>>, vector<1x16x128xf32>
    %398 = vector.shape_cast %397 : vector<1x16x128xf32> to vector<16x128xf32>
    %399 = vector.broadcast %396 : f32 to vector<16x128xf32>
    %400 = arith.mulf %399, %398 : vector<16x128xf32>
    %c11_245 = arith.constant 11 : index
    %c1_246 = arith.constant 1 : index
    %401 = memref.load %arg2[%c11_245, %c1_246] : memref<16x4xf32, #tpu.memory_space<smem>>
    %c1_247 = arith.constant 1 : index
    %c0_248 = arith.constant 0 : index
    %c0_249 = arith.constant 0 : index
    %402 = vector.load %arg1[%c1_247, %c0_248, %c0_249] : memref<4x16x128xf32, #tpu.memory_space<vmem>>, vector<1x16x128xf32>
    %403 = vector.shape_cast %402 : vector<1x16x128xf32> to vector<16x128xf32>
    %404 = vector.broadcast %401 : f32 to vector<16x128xf32>
    %405 = arith.mulf %404, %403 : vector<16x128xf32>
    %406 = arith.addf %400, %405 : vector<16x128xf32>
    %c11_250 = arith.constant 11 : index
    %c2_251 = arith.constant 2 : index
    %407 = memref.load %arg2[%c11_250, %c2_251] : memref<16x4xf32, #tpu.memory_space<smem>>
    %c2_252 = arith.constant 2 : index
    %c0_253 = arith.constant 0 : index
    %c0_254 = arith.constant 0 : index
    %408 = vector.load %arg1[%c2_252, %c0_253, %c0_254] : memref<4x16x128xf32, #tpu.memory_space<vmem>>, vector<1x16x128xf32>
    %409 = vector.shape_cast %408 : vector<1x16x128xf32> to vector<16x128xf32>
    %410 = vector.broadcast %407 : f32 to vector<16x128xf32>
    %411 = arith.mulf %410, %409 : vector<16x128xf32>
    %412 = arith.addf %406, %411 : vector<16x128xf32>
    %c11_255 = arith.constant 11 : index
    %c3_256 = arith.constant 3 : index
    %413 = memref.load %arg2[%c11_255, %c3_256] : memref<16x4xf32, #tpu.memory_space<smem>>
    %c3_257 = arith.constant 3 : index
    %c0_258 = arith.constant 0 : index
    %c0_259 = arith.constant 0 : index
    %414 = vector.load %arg1[%c3_257, %c0_258, %c0_259] : memref<4x16x128xf32, #tpu.memory_space<vmem>>, vector<1x16x128xf32>
    %415 = vector.shape_cast %414 : vector<1x16x128xf32> to vector<16x128xf32>
    %416 = vector.broadcast %413 : f32 to vector<16x128xf32>
    %417 = arith.mulf %416, %415 : vector<16x128xf32>
    %418 = arith.addf %412, %417 : vector<16x128xf32>
    %cst_260 = arith.constant 0.000000e+00 : f32
    %419 = vector.broadcast %cst_260 : f32 to vector<16x128xf32>
    %420 = arith.maximumf %418, %419 : vector<16x128xf32>
    %421 = vector.shape_cast %420 : vector<16x128xf32> to vector<1x16x128xf32>
    %cst_261 = arith.constant dense<0.000000e+00> : vector<1xf32>
    %422 = vector.multi_reduction <add>, %421, %cst_261 [1, 2] : vector<1x16x128xf32> to vector<1xf32>
    %423 = vector.shape_cast %422 : vector<1xf32> to vector<1x1x1xf32>
    %424 = vector.extract %423[0, 0, 0] : f32 from vector<1x1x1xf32>
    %425 = vector.broadcast %424 : f32 to vector<1x1xf32>
    %426 = arith.mulf %420, %420 : vector<16x128xf32>
    %427 = vector.shape_cast %426 : vector<16x128xf32> to vector<1x16x128xf32>
    %cst_262 = arith.constant dense<0.000000e+00> : vector<1xf32>
    %428 = vector.multi_reduction <add>, %427, %cst_262 [1, 2] : vector<1x16x128xf32> to vector<1xf32>
    %429 = vector.shape_cast %428 : vector<1xf32> to vector<1x1x1xf32>
    %430 = vector.extract %429[0, 0, 0] : f32 from vector<1x1x1xf32>
    %431 = vector.broadcast %430 : f32 to vector<1x1xf32>
    %c12 = arith.constant 12 : index
    %c0_263 = arith.constant 0 : index
    %432 = memref.load %arg2[%c12, %c0_263] : memref<16x4xf32, #tpu.memory_space<smem>>
    %c0_264 = arith.constant 0 : index
    %c0_265 = arith.constant 0 : index
    %c0_266 = arith.constant 0 : index
    %433 = vector.load %arg1[%c0_264, %c0_265, %c0_266] : memref<4x16x128xf32, #tpu.memory_space<vmem>>, vector<1x16x128xf32>
    %434 = vector.shape_cast %433 : vector<1x16x128xf32> to vector<16x128xf32>
    %435 = vector.broadcast %432 : f32 to vector<16x128xf32>
    %436 = arith.mulf %435, %434 : vector<16x128xf32>
    %c12_267 = arith.constant 12 : index
    %c1_268 = arith.constant 1 : index
    %437 = memref.load %arg2[%c12_267, %c1_268] : memref<16x4xf32, #tpu.memory_space<smem>>
    %c1_269 = arith.constant 1 : index
    %c0_270 = arith.constant 0 : index
    %c0_271 = arith.constant 0 : index
    %438 = vector.load %arg1[%c1_269, %c0_270, %c0_271] : memref<4x16x128xf32, #tpu.memory_space<vmem>>, vector<1x16x128xf32>
    %439 = vector.shape_cast %438 : vector<1x16x128xf32> to vector<16x128xf32>
    %440 = vector.broadcast %437 : f32 to vector<16x128xf32>
    %441 = arith.mulf %440, %439 : vector<16x128xf32>
    %442 = arith.addf %436, %441 : vector<16x128xf32>
    %c12_272 = arith.constant 12 : index
    %c2_273 = arith.constant 2 : index
    %443 = memref.load %arg2[%c12_272, %c2_273] : memref<16x4xf32, #tpu.memory_space<smem>>
    %c2_274 = arith.constant 2 : index
    %c0_275 = arith.constant 0 : index
    %c0_276 = arith.constant 0 : index
    %444 = vector.load %arg1[%c2_274, %c0_275, %c0_276] : memref<4x16x128xf32, #tpu.memory_space<vmem>>, vector<1x16x128xf32>
    %445 = vector.shape_cast %444 : vector<1x16x128xf32> to vector<16x128xf32>
    %446 = vector.broadcast %443 : f32 to vector<16x128xf32>
    %447 = arith.mulf %446, %445 : vector<16x128xf32>
    %448 = arith.addf %442, %447 : vector<16x128xf32>
    %c12_277 = arith.constant 12 : index
    %c3_278 = arith.constant 3 : index
    %449 = memref.load %arg2[%c12_277, %c3_278] : memref<16x4xf32, #tpu.memory_space<smem>>
    %c3_279 = arith.constant 3 : index
    %c0_280 = arith.constant 0 : index
    %c0_281 = arith.constant 0 : index
    %450 = vector.load %arg1[%c3_279, %c0_280, %c0_281] : memref<4x16x128xf32, #tpu.memory_space<vmem>>, vector<1x16x128xf32>
    %451 = vector.shape_cast %450 : vector<1x16x128xf32> to vector<16x128xf32>
    %452 = vector.broadcast %449 : f32 to vector<16x128xf32>
    %453 = arith.mulf %452, %451 : vector<16x128xf32>
    %454 = arith.addf %448, %453 : vector<16x128xf32>
    %cst_282 = arith.constant 0.000000e+00 : f32
    %455 = vector.broadcast %cst_282 : f32 to vector<16x128xf32>
    %456 = arith.maximumf %454, %455 : vector<16x128xf32>
    %457 = vector.shape_cast %456 : vector<16x128xf32> to vector<1x16x128xf32>
    %cst_283 = arith.constant dense<0.000000e+00> : vector<1xf32>
    %458 = vector.multi_reduction <add>, %457, %cst_283 [1, 2] : vector<1x16x128xf32> to vector<1xf32>
    %459 = vector.shape_cast %458 : vector<1xf32> to vector<1x1x1xf32>
    %460 = vector.extract %459[0, 0, 0] : f32 from vector<1x1x1xf32>
    %461 = vector.broadcast %460 : f32 to vector<1x1xf32>
    %462 = arith.mulf %456, %456 : vector<16x128xf32>
    %463 = vector.shape_cast %462 : vector<16x128xf32> to vector<1x16x128xf32>
    %cst_284 = arith.constant dense<0.000000e+00> : vector<1xf32>
    %464 = vector.multi_reduction <add>, %463, %cst_284 [1, 2] : vector<1x16x128xf32> to vector<1xf32>
    %465 = vector.shape_cast %464 : vector<1xf32> to vector<1x1x1xf32>
    %466 = vector.extract %465[0, 0, 0] : f32 from vector<1x1x1xf32>
    %467 = vector.broadcast %466 : f32 to vector<1x1xf32>
    %c13 = arith.constant 13 : index
    %c0_285 = arith.constant 0 : index
    %468 = memref.load %arg2[%c13, %c0_285] : memref<16x4xf32, #tpu.memory_space<smem>>
    %c0_286 = arith.constant 0 : index
    %c0_287 = arith.constant 0 : index
    %c0_288 = arith.constant 0 : index
    %469 = vector.load %arg1[%c0_286, %c0_287, %c0_288] : memref<4x16x128xf32, #tpu.memory_space<vmem>>, vector<1x16x128xf32>
    %470 = vector.shape_cast %469 : vector<1x16x128xf32> to vector<16x128xf32>
    %471 = vector.broadcast %468 : f32 to vector<16x128xf32>
    %472 = arith.mulf %471, %470 : vector<16x128xf32>
    %c13_289 = arith.constant 13 : index
    %c1_290 = arith.constant 1 : index
    %473 = memref.load %arg2[%c13_289, %c1_290] : memref<16x4xf32, #tpu.memory_space<smem>>
    %c1_291 = arith.constant 1 : index
    %c0_292 = arith.constant 0 : index
    %c0_293 = arith.constant 0 : index
    %474 = vector.load %arg1[%c1_291, %c0_292, %c0_293] : memref<4x16x128xf32, #tpu.memory_space<vmem>>, vector<1x16x128xf32>
    %475 = vector.shape_cast %474 : vector<1x16x128xf32> to vector<16x128xf32>
    %476 = vector.broadcast %473 : f32 to vector<16x128xf32>
    %477 = arith.mulf %476, %475 : vector<16x128xf32>
    %478 = arith.addf %472, %477 : vector<16x128xf32>
    %c13_294 = arith.constant 13 : index
    %c2_295 = arith.constant 2 : index
    %479 = memref.load %arg2[%c13_294, %c2_295] : memref<16x4xf32, #tpu.memory_space<smem>>
    %c2_296 = arith.constant 2 : index
    %c0_297 = arith.constant 0 : index
    %c0_298 = arith.constant 0 : index
    %480 = vector.load %arg1[%c2_296, %c0_297, %c0_298] : memref<4x16x128xf32, #tpu.memory_space<vmem>>, vector<1x16x128xf32>
    %481 = vector.shape_cast %480 : vector<1x16x128xf32> to vector<16x128xf32>
    %482 = vector.broadcast %479 : f32 to vector<16x128xf32>
    %483 = arith.mulf %482, %481 : vector<16x128xf32>
    %484 = arith.addf %478, %483 : vector<16x128xf32>
    %c13_299 = arith.constant 13 : index
    %c3_300 = arith.constant 3 : index
    %485 = memref.load %arg2[%c13_299, %c3_300] : memref<16x4xf32, #tpu.memory_space<smem>>
    %c3_301 = arith.constant 3 : index
    %c0_302 = arith.constant 0 : index
    %c0_303 = arith.constant 0 : index
    %486 = vector.load %arg1[%c3_301, %c0_302, %c0_303] : memref<4x16x128xf32, #tpu.memory_space<vmem>>, vector<1x16x128xf32>
    %487 = vector.shape_cast %486 : vector<1x16x128xf32> to vector<16x128xf32>
    %488 = vector.broadcast %485 : f32 to vector<16x128xf32>
    %489 = arith.mulf %488, %487 : vector<16x128xf32>
    %490 = arith.addf %484, %489 : vector<16x128xf32>
    %cst_304 = arith.constant 0.000000e+00 : f32
    %491 = vector.broadcast %cst_304 : f32 to vector<16x128xf32>
    %492 = arith.maximumf %490, %491 : vector<16x128xf32>
    %493 = vector.shape_cast %492 : vector<16x128xf32> to vector<1x16x128xf32>
    %cst_305 = arith.constant dense<0.000000e+00> : vector<1xf32>
    %494 = vector.multi_reduction <add>, %493, %cst_305 [1, 2] : vector<1x16x128xf32> to vector<1xf32>
    %495 = vector.shape_cast %494 : vector<1xf32> to vector<1x1x1xf32>
    %496 = vector.extract %495[0, 0, 0] : f32 from vector<1x1x1xf32>
    %497 = vector.broadcast %496 : f32 to vector<1x1xf32>
    %498 = arith.mulf %492, %492 : vector<16x128xf32>
    %499 = vector.shape_cast %498 : vector<16x128xf32> to vector<1x16x128xf32>
    %cst_306 = arith.constant dense<0.000000e+00> : vector<1xf32>
    %500 = vector.multi_reduction <add>, %499, %cst_306 [1, 2] : vector<1x16x128xf32> to vector<1xf32>
    %501 = vector.shape_cast %500 : vector<1xf32> to vector<1x1x1xf32>
    %502 = vector.extract %501[0, 0, 0] : f32 from vector<1x1x1xf32>
    %503 = vector.broadcast %502 : f32 to vector<1x1xf32>
    %c14 = arith.constant 14 : index
    %c0_307 = arith.constant 0 : index
    %504 = memref.load %arg2[%c14, %c0_307] : memref<16x4xf32, #tpu.memory_space<smem>>
    %c0_308 = arith.constant 0 : index
    %c0_309 = arith.constant 0 : index
    %c0_310 = arith.constant 0 : index
    %505 = vector.load %arg1[%c0_308, %c0_309, %c0_310] : memref<4x16x128xf32, #tpu.memory_space<vmem>>, vector<1x16x128xf32>
    %506 = vector.shape_cast %505 : vector<1x16x128xf32> to vector<16x128xf32>
    %507 = vector.broadcast %504 : f32 to vector<16x128xf32>
    %508 = arith.mulf %507, %506 : vector<16x128xf32>
    %c14_311 = arith.constant 14 : index
    %c1_312 = arith.constant 1 : index
    %509 = memref.load %arg2[%c14_311, %c1_312] : memref<16x4xf32, #tpu.memory_space<smem>>
    %c1_313 = arith.constant 1 : index
    %c0_314 = arith.constant 0 : index
    %c0_315 = arith.constant 0 : index
    %510 = vector.load %arg1[%c1_313, %c0_314, %c0_315] : memref<4x16x128xf32, #tpu.memory_space<vmem>>, vector<1x16x128xf32>
    %511 = vector.shape_cast %510 : vector<1x16x128xf32> to vector<16x128xf32>
    %512 = vector.broadcast %509 : f32 to vector<16x128xf32>
    %513 = arith.mulf %512, %511 : vector<16x128xf32>
    %514 = arith.addf %508, %513 : vector<16x128xf32>
    %c14_316 = arith.constant 14 : index
    %c2_317 = arith.constant 2 : index
    %515 = memref.load %arg2[%c14_316, %c2_317] : memref<16x4xf32, #tpu.memory_space<smem>>
    %c2_318 = arith.constant 2 : index
    %c0_319 = arith.constant 0 : index
    %c0_320 = arith.constant 0 : index
    %516 = vector.load %arg1[%c2_318, %c0_319, %c0_320] : memref<4x16x128xf32, #tpu.memory_space<vmem>>, vector<1x16x128xf32>
    %517 = vector.shape_cast %516 : vector<1x16x128xf32> to vector<16x128xf32>
    %518 = vector.broadcast %515 : f32 to vector<16x128xf32>
    %519 = arith.mulf %518, %517 : vector<16x128xf32>
    %520 = arith.addf %514, %519 : vector<16x128xf32>
    %c14_321 = arith.constant 14 : index
    %c3_322 = arith.constant 3 : index
    %521 = memref.load %arg2[%c14_321, %c3_322] : memref<16x4xf32, #tpu.memory_space<smem>>
    %c3_323 = arith.constant 3 : index
    %c0_324 = arith.constant 0 : index
    %c0_325 = arith.constant 0 : index
    %522 = vector.load %arg1[%c3_323, %c0_324, %c0_325] : memref<4x16x128xf32, #tpu.memory_space<vmem>>, vector<1x16x128xf32>
    %523 = vector.shape_cast %522 : vector<1x16x128xf32> to vector<16x128xf32>
    %524 = vector.broadcast %521 : f32 to vector<16x128xf32>
    %525 = arith.mulf %524, %523 : vector<16x128xf32>
    %526 = arith.addf %520, %525 : vector<16x128xf32>
    %cst_326 = arith.constant 0.000000e+00 : f32
    %527 = vector.broadcast %cst_326 : f32 to vector<16x128xf32>
    %528 = arith.maximumf %526, %527 : vector<16x128xf32>
    %529 = vector.shape_cast %528 : vector<16x128xf32> to vector<1x16x128xf32>
    %cst_327 = arith.constant dense<0.000000e+00> : vector<1xf32>
    %530 = vector.multi_reduction <add>, %529, %cst_327 [1, 2] : vector<1x16x128xf32> to vector<1xf32>
    %531 = vector.shape_cast %530 : vector<1xf32> to vector<1x1x1xf32>
    %532 = vector.extract %531[0, 0, 0] : f32 from vector<1x1x1xf32>
    %533 = vector.broadcast %532 : f32 to vector<1x1xf32>
    %534 = arith.mulf %528, %528 : vector<16x128xf32>
    %535 = vector.shape_cast %534 : vector<16x128xf32> to vector<1x16x128xf32>
    %cst_328 = arith.constant dense<0.000000e+00> : vector<1xf32>
    %536 = vector.multi_reduction <add>, %535, %cst_328 [1, 2] : vector<1x16x128xf32> to vector<1xf32>
    %537 = vector.shape_cast %536 : vector<1xf32> to vector<1x1x1xf32>
    %538 = vector.extract %537[0, 0, 0] : f32 from vector<1x1x1xf32>
    %539 = vector.broadcast %538 : f32 to vector<1x1xf32>
    %c15 = arith.constant 15 : index
    %c0_329 = arith.constant 0 : index
    %540 = memref.load %arg2[%c15, %c0_329] : memref<16x4xf32, #tpu.memory_space<smem>>
    %c0_330 = arith.constant 0 : index
    %c0_331 = arith.constant 0 : index
    %c0_332 = arith.constant 0 : index
    %541 = vector.load %arg1[%c0_330, %c0_331, %c0_332] : memref<4x16x128xf32, #tpu.memory_space<vmem>>, vector<1x16x128xf32>
    %542 = vector.shape_cast %541 : vector<1x16x128xf32> to vector<16x128xf32>
    %543 = vector.broadcast %540 : f32 to vector<16x128xf32>
    %544 = arith.mulf %543, %542 : vector<16x128xf32>
    %c15_333 = arith.constant 15 : index
    %c1_334 = arith.constant 1 : index
    %545 = memref.load %arg2[%c15_333, %c1_334] : memref<16x4xf32, #tpu.memory_space<smem>>
    %c1_335 = arith.constant 1 : index
    %c0_336 = arith.constant 0 : index
    %c0_337 = arith.constant 0 : index
    %546 = vector.load %arg1[%c1_335, %c0_336, %c0_337] : memref<4x16x128xf32, #tpu.memory_space<vmem>>, vector<1x16x128xf32>
    %547 = vector.shape_cast %546 : vector<1x16x128xf32> to vector<16x128xf32>
    %548 = vector.broadcast %545 : f32 to vector<16x128xf32>
    %549 = arith.mulf %548, %547 : vector<16x128xf32>
    %550 = arith.addf %544, %549 : vector<16x128xf32>
    %c15_338 = arith.constant 15 : index
    %c2_339 = arith.constant 2 : index
    %551 = memref.load %arg2[%c15_338, %c2_339] : memref<16x4xf32, #tpu.memory_space<smem>>
    %c2_340 = arith.constant 2 : index
    %c0_341 = arith.constant 0 : index
    %c0_342 = arith.constant 0 : index
    %552 = vector.load %arg1[%c2_340, %c0_341, %c0_342] : memref<4x16x128xf32, #tpu.memory_space<vmem>>, vector<1x16x128xf32>
    %553 = vector.shape_cast %552 : vector<1x16x128xf32> to vector<16x128xf32>
    %554 = vector.broadcast %551 : f32 to vector<16x128xf32>
    %555 = arith.mulf %554, %553 : vector<16x128xf32>
    %556 = arith.addf %550, %555 : vector<16x128xf32>
    %c15_343 = arith.constant 15 : index
    %c3_344 = arith.constant 3 : index
    %557 = memref.load %arg2[%c15_343, %c3_344] : memref<16x4xf32, #tpu.memory_space<smem>>
    %c3_345 = arith.constant 3 : index
    %c0_346 = arith.constant 0 : index
    %c0_347 = arith.constant 0 : index
    %558 = vector.load %arg1[%c3_345, %c0_346, %c0_347] : memref<4x16x128xf32, #tpu.memory_space<vmem>>, vector<1x16x128xf32>
    %559 = vector.shape_cast %558 : vector<1x16x128xf32> to vector<16x128xf32>
    %560 = vector.broadcast %557 : f32 to vector<16x128xf32>
    %561 = arith.mulf %560, %559 : vector<16x128xf32>
    %562 = arith.addf %556, %561 : vector<16x128xf32>
    %cst_348 = arith.constant 0.000000e+00 : f32
    %563 = vector.broadcast %cst_348 : f32 to vector<16x128xf32>
    %564 = arith.maximumf %562, %563 : vector<16x128xf32>
    %565 = vector.shape_cast %564 : vector<16x128xf32> to vector<1x16x128xf32>
    %cst_349 = arith.constant dense<0.000000e+00> : vector<1xf32>
    %566 = vector.multi_reduction <add>, %565, %cst_349 [1, 2] : vector<1x16x128xf32> to vector<1xf32>
    %567 = vector.shape_cast %566 : vector<1xf32> to vector<1x1x1xf32>
    %568 = vector.extract %567[0, 0, 0] : f32 from vector<1x1x1xf32>
    %569 = vector.broadcast %568 : f32 to vector<1x1xf32>
    %570 = arith.mulf %564, %564 : vector<16x128xf32>
    %571 = vector.shape_cast %570 : vector<16x128xf32> to vector<1x16x128xf32>
    %cst_350 = arith.constant dense<0.000000e+00> : vector<1xf32>
    %572 = vector.multi_reduction <add>, %571, %cst_350 [1, 2] : vector<1x16x128xf32> to vector<1xf32>
    %573 = vector.shape_cast %572 : vector<1xf32> to vector<1x1x1xf32>
    %574 = vector.extract %573[0, 0, 0] : f32 from vector<1x1x1xf32>
    %575 = vector.broadcast %574 : f32 to vector<1x1xf32>
    %576 = tpu.concatenate %29, %65, %101, %137, %173, %209, %245, %281, %317, %353, %389, %425, %461, %497, %533, %569 in 1 : vector<1x1xf32>, vector<1x1xf32>, vector<1x1xf32>, vector<1x1xf32>, vector<1x1xf32>, vector<1x1xf32>, vector<1x1xf32>, vector<1x1xf32>, vector<1x1xf32>, vector<1x1xf32>, vector<1x1xf32>, vector<1x1xf32>, vector<1x1xf32>, vector<1x1xf32>, vector<1x1xf32>, vector<1x1xf32> -> vector<1x16xf32>
    %577 = tpu.concatenate %35, %71, %107, %143, %179, %215, %251, %287, %323, %359, %395, %431, %467, %503, %539, %575 in 1 : vector<1x1xf32>, vector<1x1xf32>, vector<1x1xf32>, vector<1x1xf32>, vector<1x1xf32>, vector<1x1xf32>, vector<1x1xf32>, vector<1x1xf32>, vector<1x1xf32>, vector<1x1xf32>, vector<1x1xf32>, vector<1x1xf32>, vector<1x1xf32>, vector<1x1xf32>, vector<1x1xf32>, vector<1x1xf32> -> vector<1x16xf32>
    %578 = tpu.concatenate %576, %577 in 0 : vector<1x16xf32>, vector<1x16xf32> -> vector<2x16xf32>
    %579 = vector.shape_cast %578 : vector<2x16xf32> to vector<1x2x16xf32>
    %c0_351 = arith.constant 0 : index
    %c0_352 = arith.constant 0 : index
    %c0_353 = arith.constant 0 : index
    %580 = vector.load %arg3[%c0_351, %c0_352, %c0_353] : memref<1x2x16xf32, #tpu.memory_space<vmem>>, vector<1x2x16xf32>
    tpu.vector_store %arg3[%c0_351, %c0_352, %c0_353], %579 {strides = array<i32>} : memref<1x2x16xf32, #tpu.memory_space<vmem>>, vector<1x2x16xf32>,
    return
  }
  func.func @transform_0(%arg0: i32) -> (i32, i32, i32) {
    %c0_i32 = arith.constant 0 : i32
    %c0_i32_0 = arith.constant 0 : i32
    %c0_i32_1 = arith.constant 0 : i32
    return %c0_i32, %c0_i32_0, %arg0 : i32, i32, i32
  }
  func.func @transform_1(%arg0: i32) -> (i32, i32) {
    %c0_i32 = arith.constant 0 : i32
    %c0_i32_0 = arith.constant 0 : i32
    %c0_i32_1 = arith.constant 0 : i32
    return %c0_i32, %c0_i32_0 : i32, i32
  }
  func.func @transform_2(%arg0: i32) -> (i32, i32, i32) {
    %c0_i32 = arith.constant 0 : i32
    %c0_i32_0 = arith.constant 0 : i32
    %c0_i32_1 = arith.constant 0 : i32
    return %arg0, %c0_i32, %c0_i32_0 : i32, i32, i32
  }
}

</mosaic_0001>

<llo_original>
// kernel: tpu_custom_call.1
$region0: #{tpu_custom_call.1}
  #allocation0 [shape = 'u32[]', space=smem, size = 0x4, offset = 0x4, fixed_abs, tag = 'smem constant byte address 0x4 - core index']
  #allocation1 [shape = 'u32[144,128]{1,0:T(1,128)}', space=vmem, size = 0x12000, scoped, tag = 'internal scratch']
  %s0 = inlined_call_operand.hbm [shape: f32[4,16,128], index: 0, kind: input, shape index: {}]
  %s1 = inlined_call_operand.vmem [shape: f32[16,4], index: 1, kind: input, shape index: {}]
  %s2 = inlined_call_operand.hbm [shape: f32[1,2,16], index: 2, kind: output, shape index: {}]
  %s3 = sld [smem:[#allocation0]]
  $region26: #{tpu_custom_call.1} parent=0
    _
  %s5 = ssub.s32 1, %s3
  %s6 = scalar_select 0, %s5, %s3
  $region1: #{tpu_custom_call.1} parent=0
    #allocation2 [shape = 'u8[32768]{0}', space=vmem, size = 0x8000, scoped, tag = 'input window, operand 0, single buffered']
    #allocation3 [shape = 's32[1]{0}', space=sflag, size = 0x4, scoped, tag = 'scoped memory for tpu_custom_call.1']
    #allocation4 [shape = 's32[1]{0}', space=sflag, size = 0x4, scoped, tag = 'scoped memory for tpu_custom_call.1']
    #allocation5 [shape = 's32[1]{0}', space=sflag, size = 0x4, scoped, tag = 'scoped memory for tpu_custom_call.1']
    #allocation6 [shape = 'u8[8192]{0}', space=smem, size = 0x2000, scoped, tag = 'input window, operand 1, single buffered']
    #allocation7 [shape = 'u8[1024]{0}', space=vmem, size = 0x400, scoped, tag = 'output window, operand 0, single buffered']
    %7 = vsyncpa [#allocation3], 0
    %8 = vsyncpa [#allocation5], 0
    %9 = vsyncpa [#allocation4], 0
    // Predicated region
    $region2: #{tpu_custom_call.1} parent=1 // pred_check
      _
    $region3: #{tpu_custom_call.1} parent=1 // pred_check_branch
      %11 = sbr.rel (0) target = $region5
    $region4: #{tpu_custom_call.1} parent=1 // pred_region
      %s13 = ssub.s32 1024, 1024
      %14 = vsyncadd [#allocation3], %s13
      %s15 = sshll.u32 [#allocation2], 4
      %s16 = int_to_ptr.vmem [resolvable:$true] %s15
      %21 = dma.hbm_to_vmem [thread:$0]  %s0, 1024, %s16, [#allocation3], 128, 128, 8
    $region5: #{tpu_custom_call.1} parent=1 // pred_fallthru
      _
    // Predicated region
    $region6: #{tpu_custom_call.1} parent=1 // pred_check
      _
    $region7: #{tpu_custom_call.1} parent=1 // pred_check_branch
      %23 = sbr.rel (0) target = $region9
    $region8: #{tpu_custom_call.1} parent=1 // pred_region
      %s25 = ssub.s32 256, 256
      %26 = vsyncadd [#allocation5], %s25
      %s27 = sshll.u32 %s1, 4
      %s28 = int_to_ptr.vmem [resolvable:$true] %s27
      %33 = dma.vmem_to_smem %s28, 256, [#allocation6], [#allocation5], 128, 128, 8
    $region9: #{tpu_custom_call.1} parent=1 // pred_fallthru
      _
    // Predicated region
    $region10: #{tpu_custom_call.1} parent=1 // pred_check
      _
    $region11: #{tpu_custom_call.1} parent=1 // pred_check_branch
      %35 = sbr.rel (0) target = $region13
    $region12: #{tpu_custom_call.1} parent=1 // pred_region
      %36 = dma.done [#allocation3], 1024
    $region13: #{tpu_custom_call.1} parent=1 // pred_fallthru
      _
    // Predicated region
    $region14: #{tpu_custom_call.1} parent=1 // pred_check
      _
    $region15: #{tpu_custom_call.1} parent=1 // pred_check_branch
      %38 = sbr.rel (0) target = $region17
    $region16: #{tpu_custom_call.1} parent=1 // pred_region
      %39 = dma.done [#allocation5], 256
    $region17: #{tpu_custom_call.1} parent=1 // pred_fallthru
      _
    %40 = sfence
    %s41 = sld [smem:[#allocation6]]
    %v42 = vld [vmem:[#allocation2] sm:$0xff]
    %v43 = vld [vmem:[#allocation2 + $0x8] sm:$0xff]
    %v44 = vstv %s41
    %v45 = vmul.f32 %v44, %v42
    %v46 = vmul.f32 %v44, %v43
    %s47 = sld [smem:[#allocation6 + $0x1]]
    %s48 = scalar_lea.vmem [#allocation2], 16
    %v49 = vld [vmem:[%s48] sm:$0xff]
    %v50 = vld [vmem:[%s48 + $0x8] sm:$0xff]
    %v51 = vstv %s47
    %v52 = vmul.f32 %v51, %v49
    %v53 = vmul.f32 %v51, %v50
    %v54 = vadd.f32 %v45, %v52
    %v55 = vadd.f32 %v46, %v53
    %s56 = sld [smem:[#allocation6 + $0x2]]
    %s57 = scalar_lea.vmem [#allocation2], 32
    %v58 = vld [vmem:[%s57] sm:$0xff]
    %v59 = vld [vmem:[%s57 + $0x8] sm:$0xff]
    %v60 = vstv %s56
    %v61 = vmul.f32 %v60, %v58
    %v62 = vmul.f32 %v60, %v59
    %v63 = vadd.f32 %v54, %v61
    %v64 = vadd.f32 %v55, %v62
    %s65 = sld [smem:[#allocation6 + $0x3]]
    %s66 = scalar_lea.vmem [#allocation2], 48
    %v67 = vld [vmem:[%s66] sm:$0xff]
    %v68 = vld [vmem:[%s66 + $0x8] sm:$0xff]
    %v69 = vstv %s65
    %v70 = vmul.f32 %v69, %v67
    %v71 = vmul.f32 %v69, %v68
    %v72 = vadd.f32 %v63, %v70
    %v73 = vadd.f32 %v64, %v71
    %v74 = vmax.f32 %v72, 0.0
    %v75 = vmax.f32 %v73, 0.0
    %v76 = vadd.f32 %v74, %v75
    %77 = vadd.xlane.f32.xlu0 %v76
    %v78 = vpop.xlane.xlu0 %77
    %v79 = vrot.slane %v78, 4
    %v80 = vadd.f32 %v78, %v79
    %v81 = vrot.slane %v80, 2
    %v82 = vadd.f32 %v80, %v81
    %v83 = vrot.slane %v82, 1
    %v84 = vadd.f32 %v82, %v83
    %s85 = vtos %v84
    %v86 = vstv %s85
    %v87 = vmul.f32 %v74, %v74
    %v88 = vmul.f32 %v75, %v75
    %v89 = vadd.f32 %v87, %v88
    %90 = vadd.xlane.f32.xlu0 %v89
    %v91 = vpop.xlane.xlu0 %90
    %v92 = vrot.slane %v91, 4
    %v93 = vadd.f32 %v91, %v92
    %v94 = vrot.slane %v93, 2
    %v95 = vadd.f32 %v93, %v94
    %v96 = vrot.slane %v95, 1
    %v97 = vadd.f32 %v95, %v96
    %s98 = vtos %v97
    %v99 = vstv %s98
    %s100 = sld [smem:[#allocation6 + $0x80]]
    %v101 = vstv %s100
    %v102 = vmul.f32 %v101, %v42
    %v103 = vmul.f32 %v101, %v43
    %s104 = sld [smem:[#allocation6 + $0x81]]
    %v105 = vstv %s104
    %v106 = vmul.f32 %v105, %v49
    %v107 = vmul.f32 %v105, %v50
    %v108 = vadd.f32 %v102, %v106
    %v109 = vadd.f32 %v103, %v107
    %s110 = sld [smem:[#allocation6 + $0x82]]
    %v111 = vstv %s110
    %v112 = vmul.f32 %v111, %v58
    %v113 = vmul.f32 %v111, %v59
    %v114 = vadd.f32 %v108, %v112
    %v115 = vadd.f32 %v109, %v113
    %s116 = sld [smem:[#allocation6 + $0x83]]
    %v117 = vstv %s116
    %v118 = vmul.f32 %v117, %v67
    %v119 = vmul.f32 %v117, %v68
    %v120 = vadd.f32 %v114, %v118
    %v121 = vadd.f32 %v115, %v119
    %v122 = vmax.f32 %v120, 0.0
    %v123 = vmax.f32 %v121, 0.0
    %v124 = vadd.f32 %v122, %v123
    %125 = vadd.xlane.f32.xlu0 %v124
    %v126 = vpop.xlane.xlu0 %125
    %v127 = vrot.slane %v126, 4
    %v128 = vadd.f32 %v126, %v127
    %v129 = vrot.slane %v128, 2
    %v130 = vadd.f32 %v128, %v129
    %v131 = vrot.slane %v130, 1
    %v132 = vadd.f32 %v130, %v131
    %s133 = vtos %v132
    %v134 = vstv %s133
    %v135 = vmul.f32 %v122, %v122
    %v136 = vmul.f32 %v123, %v123
    %v137 = vadd.f32 %v135, %v136
    %138 = vadd.xlane.f32.xlu0 %v137
    %v139 = vpop.xlane.xlu0 %138
    %v140 = vrot.slane %v139, 4
    %v141 = vadd.f32 %v139, %v140
    %v142 = vrot.slane %v141, 2
    %v143 = vadd.f32 %v141, %v142
    %v144 = vrot.slane %v143, 1
    %v145 = vadd.f32 %v143, %v144
    %s146 = vtos %v145
    %v147 = vstv %s146
    %s148 = sld [smem:[#allocation6 + $0x100]]
    %v149 = vstv %s148
    %v150 = vmul.f32 %v149, %v42
    %v151 = vmul.f32 %v149, %v43
    %s152 = sld [smem:[#allocation6 + $0x101]]
    %v153 = vstv %s152
    %v154 = vmul.f32 %v153, %v49
    %v155 = vmul.f32 %v153, %v50
    %v156 = vadd.f32 %v150, %v154
    %v157 = vadd.f32 %v151, %v155
    %s158 = sld [smem:[#allocation6 + $0x102]]
    %v159 = vstv %s158
    %v160 = vmul.f32 %v159, %v58
    %v161 = vmul.f32 %v159, %v59
    %v162 = vadd.f32 %v156, %v160
    %v163 = vadd.f32 %v157, %v161
    %s164 = sld [smem:[#allocation6 + $0x103]]
    %v165 = vstv %s164
    %v166 = vmul.f32 %v165, %v67
    %v167 = vmul.f32 %v165, %v68
    %v168 = vadd.f32 %v162, %v166
    %v169 = vadd.f32 %v163, %v167
    %v170 = vmax.f32 %v168, 0.0
    %v171 = vmax.f32 %v169, 0.0
    %v172 = vadd.f32 %v170, %v171
    %173 = vadd.xlane.f32.xlu0 %v172
    %v174 = vpop.xlane.xlu0 %173
    %v175 = vrot.slane %v174, 4
    %v176 = vadd.f32 %v174, %v175
    %v177 = vrot.slane %v176, 2
    %v178 = vadd.f32 %v176, %v177
    %v179 = vrot.slane %v178, 1
    %v180 = vadd.f32 %v178, %v179
    %s181 = vtos %v180
    %v182 = vstv %s181
    %v183 = vmul.f32 %v170, %v170
    %v184 = vmul.f32 %v171, %v171
    %v185 = vadd.f32 %v183, %v184
    %186 = vadd.xlane.f32.xlu0 %v185
    %v187 = vpop.xlane.xlu0 %186
    %v188 = vrot.slane %v187, 4
    %v189 = vadd.f32 %v187, %v188
    %v190 = vrot.slane %v189, 2
    %v191 = vadd.f32 %v189, %v190
    %v192 = vrot.slane %v191, 1
    %v193 = vadd.f32 %v191, %v192
    %s194 = vtos %v193
    %v195 = vstv %s194
    %s196 = sld [smem:[#allocation6 + $0x180]]
    %v197 = vstv %s196
    %v198 = vmul.f32 %v197, %v42
    %v199 = vmul.f32 %v197, %v43
    %s200 = sld [smem:[#allocation6 + $0x181]]
    %v201 = vstv %s200
    %v202 = vmul.f32 %v201, %v49
    %v203 = vmul.f32 %v201, %v50
    %v204 = vadd.f32 %v198, %v202
    %v205 = vadd.f32 %v199, %v203
    %s206 = sld [smem:[#allocation6 + $0x182]]
    %v207 = vstv %s206
    %v208 = vmul.f32 %v207, %v58
    %v209 = vmul.f32 %v207, %v59
    %v210 = vadd.f32 %v204, %v208
    %v211 = vadd.f32 %v205, %v209
    %s212 = sld [smem:[#allocation6 + $0x183]]
    %v213 = vstv %s212
    %v214 = vmul.f32 %v213, %v67
    %v215 = vmul.f32 %v213, %v68
    %v216 = vadd.f32 %v210, %v214
    %v217 = vadd.f32 %v211, %v215
    %v218 = vmax.f32 %v216, 0.0
    %v219 = vmax.f32 %v217, 0.0
    %v220 = vadd.f32 %v218, %v219
    %221 = vadd.xlane.f32.xlu0 %v220
    %v222 = vpop.xlane.xlu0 %221
    %v223 = vrot.slane %v222, 4
    %v224 = vadd.f32 %v222, %v223
    %v225 = vrot.slane %v224, 2
    %v226 = vadd.f32 %v224, %v225
    %v227 = vrot.slane %v226, 1
    %v228 = vadd.f32 %v226, %v227
    %s229 = vtos %v228
    %v230 = vstv %s229
    %v231 = vmul.f32 %v218, %v218
    %v232 = vmul.f32 %v219, %v219
    %v233 = vadd.f32 %v231, %v232
    %234 = vadd.xlane.f32.xlu0 %v233
    %v235 = vpop.xlane.xlu0 %234
    %v236 = vrot.slane %v235, 4
    %v237 = vadd.f32 %v235, %v236
    %v238 = vrot.slane %v237, 2
    %v239 = vadd.f32 %v237, %v238
    %v240 = vrot.slane %v239, 1
    %v241 = vadd.f32 %v239, %v240
    %s242 = vtos %v241
    %v243 = vstv %s242
    %s244 = sld [smem:[#allocation6 + $0x200]]
    %v245 = vstv %s244
    %v246 = vmul.f32 %v245, %v42
    %v247 = vmul.f32 %v245, %v43
    %s248 = sld [smem:[#allocation6 + $0x201]]
    %v249 = vstv %s248
    %v250 = vmul.f32 %v249, %v49
    %v251 = vmul.f32 %v249, %v50
    %v252 = vadd.f32 %v246, %v250
    %v253 = vadd.f32 %v247, %v251
    %s254 = sld [smem:[#allocation6 + $0x202]]
    %v255 = vstv %s254
    %v256 = vmul.f32 %v255, %v58
    %v257 = vmul.f32 %v255, %v59
    %v258 = vadd.f32 %v252, %v256
    %v259 = vadd.f32 %v253, %v257
    %s260 = sld [smem:[#allocation6 + $0x203]]
    %v261 = vstv %s260
    %v262 = vmul.f32 %v261, %v67
    %v263 = vmul.f32 %v261, %v68
    %v264 = vadd.f32 %v258, %v262
    %v265 = vadd.f32 %v259, %v263
    %v266 = vmax.f32 %v264, 0.0
    %v267 = vmax.f32 %v265, 0.0
    %v268 = vadd.f32 %v266, %v267
    %269 = vadd.xlane.f32.xlu0 %v268
    %v270 = vpop.xlane.xlu0 %269
    %v271 = vrot.slane %v270, 4
    %v272 = vadd.f32 %v270, %v271
    %v273 = vrot.slane %v272, 2
    %v274 = vadd.f32 %v272, %v273
    %v275 = vrot.slane %v274, 1
    %v276 = vadd.f32 %v274, %v275
    %s277 = vtos %v276
    %v278 = vstv %s277
    %v279 = vmul.f32 %v266, %v266
    %v280 = vmul.f32 %v267, %v267
    %v281 = vadd.f32 %v279, %v280
    %282 = vadd.xlane.f32.xlu0 %v281
    %v283 = vpop.xlane.xlu0 %282
    %v284 = vrot.slane %v283, 4
    %v285 = vadd.f32 %v283, %v284
    %v286 = vrot.slane %v285, 2
    %v287 = vadd.f32 %v285, %v286
    %v288 = vrot.slane %v287, 1
    %v289 = vadd.f32 %v287, %v288
    %s290 = vtos %v289
    %v291 = vstv %s290
    %s292 = sld [smem:[#allocation6 + $0x280]]
    %v293 = vstv %s292
    %v294 = vmul.f32 %v293, %v42
    %v295 = vmul.f32 %v293, %v43
    %s296 = sld [smem:[#allocation6 + $0x281]]
    %v297 = vstv %s296
    %v298 = vmul.f32 %v297, %v49
    %v299 = vmul.f32 %v297, %v50
    %v300 = vadd.f32 %v294, %v298
    %v301 = vadd.f32 %v295, %v299
    %s302 = sld [smem:[#allocation6 + $0x282]]
    %v303 = vstv %s302
    %v304 = vmul.f32 %v303, %v58
    %v305 = vmul.f32 %v303, %v59
    %v306 = vadd.f32 %v300, %v304
    %v307 = vadd.f32 %v301, %v305
    %s308 = sld [smem:[#allocation6 + $0x283]]
    %v309 = vstv %s308
    %v310 = vmul.f32 %v309, %v67
    %v311 = vmul.f32 %v309, %v68
    %v312 = vadd.f32 %v306, %v310
    %v313 = vadd.f32 %v307, %v311
    %v314 = vmax.f32 %v312, 0.0
    %v315 = vmax.f32 %v313, 0.0
    %v316 = vadd.f32 %v314, %v315
    %317 = vadd.xlane.f32.xlu0 %v316
    %v318 = vpop.xlane.xlu0 %317
    %v319 = vrot.slane %v318, 4
    %v320 = vadd.f32 %v318, %v319
    %v321 = vrot.slane %v320, 2
    %v322 = vadd.f32 %v320, %v321
    %v323 = vrot.slane %v322, 1
    %v324 = vadd.f32 %v322, %v323
    %s325 = vtos %v324
    %v326 = vstv %s325
    %v327 = vmul.f32 %v314, %v314
    %v328 = vmul.f32 %v315, %v315
    %v329 = vadd.f32 %v327, %v328
    %330 = vadd.xlane.f32.xlu0 %v329
    %v331 = vpop.xlane.xlu0 %330
    %v332 = vrot.slane %v331, 4
    %v333 = vadd.f32 %v331, %v332
    %v334 = vrot.slane %v333, 2
    %v335 = vadd.f32 %v333, %v334
    %v336 = vrot.slane %v335, 1
    %v337 = vadd.f32 %v335, %v336
    %s338 = vtos %v337
    %v339 = vstv %s338
    %s340 = sld [smem:[#allocation6 + $0x300]]
    %v341 = vstv %s340
    %v342 = vmul.f32 %v341, %v42
    %v343 = vmul.f32 %v341, %v43
    %s344 = sld [smem:[#allocation6 + $0x301]]
    %v345 = vstv %s344
    %v346 = vmul.f32 %v345, %v49
    %v347 = vmul.f32 %v345, %v50
    %v348 = vadd.f32 %v342, %v346
    %v349 = vadd.f32 %v343, %v347
    %s350 = sld [smem:[#allocation6 + $0x302]]
    %v351 = vstv %s350
    %v352 = vmul.f32 %v351, %v58
    %v353 = vmul.f32 %v351, %v59
    %v354 = vadd.f32 %v348, %v352
    %v355 = vadd.f32 %v349, %v353
    %s356 = sld [smem:[#allocation6 + $0x303]]
    %v357 = vstv %s356
    %v358 = vmul.f32 %v357, %v67
    %v359 = vmul.f32 %v357, %v68
    %v360 = vadd.f32 %v354, %v358
    %v361 = vadd.f32 %v355, %v359
    %v362 = vmax.f32 %v360, 0.0
    %v363 = vmax.f32 %v361, 0.0
    %v364 = vadd.f32 %v362, %v363
    %365 = vadd.xlane.f32.xlu0 %v364
    %v366 = vpop.xlane.xlu0 %365
    %v367 = vrot.slane %v366, 4
    %v368 = vadd.f32 %v366, %v367
    %v369 = vrot.slane %v368, 2
    %v370 = vadd.f32 %v368, %v369
    %v371 = vrot.slane %v370, 1
    %v372 = vadd.f32 %v370, %v371
    %s373 = vtos %v372
    %v374 = vstv %s373
    %v375 = vmul.f32 %v362, %v362
    %v376 = vmul.f32 %v363, %v363
    %v377 = vadd.f32 %v375, %v376
    %378 = vadd.xlane.f32.xlu0 %v377
    %v379 = vpop.xlane.xlu0 %378
    %v380 = vrot.slane %v379, 4
    %v381 = vadd.f32 %v379, %v380
    %v382 = vrot.slane %v381, 2
    %v383 = vadd.f32 %v381, %v382
    %v384 = vrot.slane %v383, 1
    %v385 = vadd.f32 %v383, %v384
    %s386 = vtos %v385
    %v387 = vstv %s386
    %s388 = sld [smem:[#allocation6 + $0x380]]
    %v389 = vstv %s388
    %v390 = vmul.f32 %v389, %v42
    %v391 = vmul.f32 %v389, %v43
    %s392 = sld [smem:[#allocation6 + $0x381]]
    %v393 = vstv %s392
    %v394 = vmul.f32 %v393, %v49
    %v395 = vmul.f32 %v393, %v50
    %v396 = vadd.f32 %v390, %v394
    %v397 = vadd.f32 %v391, %v395
    %s398 = sld [smem:[#allocation6 + $0x382]]
    %v399 = vstv %s398
    %v400 = vmul.f32 %v399, %v58
    %v401 = vmul.f32 %v399, %v59
    %v402 = vadd.f32 %v396, %v400
    %v403 = vadd.f32 %v397, %v401
    %s404 = sld [smem:[#allocation6 + $0x383]]
    %v405 = vstv %s404
    %v406 = vmul.f32 %v405, %v67
    %v407 = vmul.f32 %v405, %v68
    %v408 = vadd.f32 %v402, %v406
    %v409 = vadd.f32 %v403, %v407
    %v410 = vmax.f32 %v408, 0.0
    %v411 = vmax.f32 %v409, 0.0
    %v412 = vadd.f32 %v410, %v411
    %413 = vadd.xlane.f32.xlu0 %v412
    %v414 = vpop.xlane.xlu0 %413
    %v415 = vrot.slane %v414, 4
    %v416 = vadd.f32 %v414, %v415
    %v417 = vrot.slane %v416, 2
    %v418 = vadd.f32 %v416, %v417
    %v419 = vrot.slane %v418, 1
    %v420 = vadd.f32 %v418, %v419
    %s421 = vtos %v420
    %v422 = vstv %s421
    %v423 = vmul.f32 %v410, %v410
    %v424 = vmul.f32 %v411, %v411
    %v425 = vadd.f32 %v423, %v424
    %426 = vadd.xlane.f32.xlu0 %v425
    %v427 = vpop.xlane.xlu0 %426
    %v428 = vrot.slane %v427, 4
    %v429 = vadd.f32 %v427, %v428
    %v430 = vrot.slane %v429, 2
    %v431 = vadd.f32 %v429, %v430
    %v432 = vrot.slane %v431, 1
    %v433 = vadd.f32 %v431, %v432
    %s434 = vtos %v433
    %v435 = vstv %s434
    %s436 = sld [smem:[#allocation6 + $0x400]]
    %v437 = vstv %s436
    %v438 = vmul.f32 %v437, %v42
    %v439 = vmul.f32 %v437, %v43
    %s440 = sld [smem:[#allocation6 + $0x401]]
    %v441 = vstv %s440
    %v442 = vmul.f32 %v441, %v49
    %v443 = vmul.f32 %v441, %v50
    %v444 = vadd.f32 %v438, %v442
    %v445 = vadd.f32 %v439, %v443
    %s446 = sld [smem:[#allocation6 + $0x402]]
    %v447 = vstv %s446
    %v448 = vmul.f32 %v447, %v58
    %v449 = vmul.f32 %v447, %v59
    %v450 = vadd.f32 %v444, %v448
    %v451 = vadd.f32 %v445, %v449
    %s452 = sld [smem:[#allocation6 + $0x403]]
    %v453 = vstv %s452
    %v454 = vmul.f32 %v453, %v67
    %v455 = vmul.f32 %v453, %v68
    %v456 = vadd.f32 %v450, %v454
    %v457 = vadd.f32 %v451, %v455
    %v458 = vmax.f32 %v456, 0.0
    %v459 = vmax.f32 %v457, 0.0
    %v460 = vadd.f32 %v458, %v459
    %461 = vadd.xlane.f32.xlu0 %v460
    %v462 = vpop.xlane.xlu0 %461
    %v463 = vrot.slane %v462, 4
    %v464 = vadd.f32 %v462, %v463
    %v465 = vrot.slane %v464, 2
    %v466 = vadd.f32 %v464, %v465
    %v467 = vrot.slane %v466, 1
    %v468 = vadd.f32 %v466, %v467
    %s469 = vtos %v468
    %v470 = vstv %s469
    %v471 = vmul.f32 %v458, %v458
    %v472 = vmul.f32 %v459, %v459
    %v473 = vadd.f32 %v471, %v472
    %474 = vadd.xlane.f32.xlu0 %v473
    %v475 = vpop.xlane.xlu0 %474
    %v476 = vrot.slane %v475, 4
    %v477 = vadd.f32 %v475, %v476
    %v478 = vrot.slane %v477, 2
    %v479 = vadd.f32 %v477, %v478
    %v480 = vrot.slane %v479, 1
    %v481 = vadd.f32 %v479, %v480
    %s482 = vtos %v481
    %v483 = vstv %s482
    %s484 = sld [smem:[#allocation6 + $0x480]]
    %v485 = vstv %s484
    %v486 = vmul.f32 %v485, %v42
    %v487 = vmul.f32 %v485, %v43
    %s488 = sld [smem:[#allocation6 + $0x481]]
    %v489 = vstv %s488
    %v490 = vmul.f32 %v489, %v49
    %v491 = vmul.f32 %v489, %v50
    %v492 = vadd.f32 %v486, %v490
    %v493 = vadd.f32 %v487, %v491
    %s494 = sld [smem:[#allocation6 + $0x482]]
    %v495 = vstv %s494
    %v496 = vmul.f32 %v495, %v58
    %v497 = vmul.f32 %v495, %v59
    %v498 = vadd.f32 %v492, %v496
    %v499 = vadd.f32 %v493, %v497
    %s500 = sld [smem:[#allocation6 + $0x483]]
    %v501 = vstv %s500
    %v502 = vmul.f32 %v501, %v67
    %v503 = vmul.f32 %v501, %v68
    %v504 = vadd.f32 %v498, %v502
    %v505 = vadd.f32 %v499, %v503
    %v506 = vmax.f32 %v504, 0.0
    %v507 = vmax.f32 %v505, 0.0
    %v508 = vadd.f32 %v506, %v507
    %509 = vadd.xlane.f32.xlu0 %v508
    %v510 = vpop.xlane.xlu0 %509
    %v511 = vrot.slane %v510, 4
    %v512 = vadd.f32 %v510, %v511
    %v513 = vrot.slane %v512, 2
    %v514 = vadd.f32 %v512, %v513
    %v515 = vrot.slane %v514, 1
    %v516 = vadd.f32 %v514, %v515
    %s517 = vtos %v516
    %v518 = vstv %s517
    %v519 = vmul.f32 %v506, %v506
    %v520 = vmul.f32 %v507, %v507
    %v521 = vadd.f32 %v519, %v520
    %522 = vadd.xlane.f32.xlu0 %v521
    %v523 = vpop.xlane.xlu0 %522
    %v524 = vrot.slane %v523, 4
    %v525 = vadd.f32 %v523, %v524
    %v526 = vrot.slane %v525, 2
    %v527 = vadd.f32 %v525, %v526
    %v528 = vrot.slane %v527, 1
    %v529 = vadd.f32 %v527, %v528
    %s530 = vtos %v529
    %v531 = vstv %s530
    %s532 = sld [smem:[#allocation6 + $0x500]]
    %v533 = vstv %s532
    %v534 = vmul.f32 %v533, %v42
    %v535 = vmul.f32 %v533, %v43
    %s536 = sld [smem:[#allocation6 + $0x501]]
    %v537 = vstv %s536
    %v538 = vmul.f32 %v537, %v49
    %v539 = vmul.f32 %v537, %v50
    %v540 = vadd.f32 %v534, %v538
    %v541 = vadd.f32 %v535, %v539
    %s542 = sld [smem:[#allocation6 + $0x502]]
    %v543 = vstv %s542
    %v544 = vmul.f32 %v543, %v58
    %v545 = vmul.f32 %v543, %v59
    %v546 = vadd.f32 %v540, %v544
    %v547 = vadd.f32 %v541, %v545
    %s548 = sld [smem:[#allocation6 + $0x503]]
    %v549 = vstv %s548
    %v550 = vmul.f32 %v549, %v67
    %v551 = vmul.f32 %v549, %v68
    %v552 = vadd.f32 %v546, %v550
    %v553 = vadd.f32 %v547, %v551
    %v554 = vmax.f32 %v552, 0.0
    %v555 = vmax.f32 %v553, 0.0
    %v556 = vadd.f32 %v554, %v555
    %557 = vadd.xlane.f32.xlu0 %v556
    %v558 = vpop.xlane.xlu0 %557
    %v559 = vrot.slane %v558, 4
    %v560 = vadd.f32 %v558, %v559
    %v561 = vrot.slane %v560, 2
    %v562 = vadd.f32 %v560, %v561
    %v563 = vrot.slane %v562, 1
    %v564 = vadd.f32 %v562, %v563
    %s565 = vtos %v564
    %v566 = vstv %s565
    %v567 = vmul.f32 %v554, %v554
    %v568 = vmul.f32 %v555, %v555
    %v569 = vadd.f32 %v567, %v568
    %570 = vadd.xlane.f32.xlu0 %v569
    %v571 = vpop.xlane.xlu0 %570
    %v572 = vrot.slane %v571, 4
    %v573 = vadd.f32 %v571, %v572
    %v574 = vrot.slane %v573, 2
    %v575 = vadd.f32 %v573, %v574
    %v576 = vrot.slane %v575, 1
    %v577 = vadd.f32 %v575, %v576
    %s578 = vtos %v577
    %v579 = vstv %s578
    %s580 = sld [smem:[#allocation6 + $0x580]]
    %v581 = vstv %s580
    %v582 = vmul.f32 %v581, %v42
    %v583 = vmul.f32 %v581, %v43
    %s584 = sld [smem:[#allocation6 + $0x581]]
    %v585 = vstv %s584
    %v586 = vmul.f32 %v585, %v49
    %v587 = vmul.f32 %v585, %v50
    %v588 = vadd.f32 %v582, %v586
    %v589 = vadd.f32 %v583, %v587
    %s590 = sld [smem:[#allocation6 + $0x582]]
    %v591 = vstv %s590
    %v592 = vmul.f32 %v591, %v58
    %v593 = vmul.f32 %v591, %v59
    %v594 = vadd.f32 %v588, %v592
    %v595 = vadd.f32 %v589, %v593
    %s596 = sld [smem:[#allocation6 + $0x583]]
    %v597 = vstv %s596
    %v598 = vmul.f32 %v597, %v67
    %v599 = vmul.f32 %v597, %v68
    %v600 = vadd.f32 %v594, %v598
    %v601 = vadd.f32 %v595, %v599
    %v602 = vmax.f32 %v600, 0.0
    %v603 = vmax.f32 %v601, 0.0
    %v604 = vadd.f32 %v602, %v603
    %605 = vadd.xlane.f32.xlu0 %v604
    %v606 = vpop.xlane.xlu0 %605
    %v607 = vrot.slane %v606, 4
    %v608 = vadd.f32 %v606, %v607
    %v609 = vrot.slane %v608, 2
    %v610 = vadd.f32 %v608, %v609
    %v611 = vrot.slane %v610, 1
    %v612 = vadd.f32 %v610, %v611
    %s613 = vtos %v612
    %v614 = vstv %s613
    %v615 = vmul.f32 %v602, %v602
    %v616 = vmul.f32 %v603, %v603
    %v617 = vadd.f32 %v615, %v616
    %618 = vadd.xlane.f32.xlu0 %v617
    %v619 = vpop.xlane.xlu0 %618
    %v620 = vrot.slane %v619, 4
    %v621 = vadd.f32 %v619, %v620
    %v622 = vrot.slane %v621, 2
    %v623 = vadd.f32 %v621, %v622
    %v624 = vrot.slane %v623, 1
    %v625 = vadd.f32 %v623, %v624
    %s626 = vtos %v625
    %v627 = vstv %s626
    %s628 = sld [smem:[#allocation6 + $0x600]]
    %v629 = vstv %s628
    %v630 = vmul.f32 %v629, %v42
    %v631 = vmul.f32 %v629, %v43
    %s632 = sld [smem:[#allocation6 + $0x601]]
    %v633 = vstv %s632
    %v634 = vmul.f32 %v633, %v49
    %v635 = vmul.f32 %v633, %v50
    %v636 = vadd.f32 %v630, %v634
    %v637 = vadd.f32 %v631, %v635
    %s638 = sld [smem:[#allocation6 + $0x602]]
    %v639 = vstv %s638
    %v640 = vmul.f32 %v639, %v58
    %v641 = vmul.f32 %v639, %v59
    %v642 = vadd.f32 %v636, %v640
    %v643 = vadd.f32 %v637, %v641
    %s644 = sld [smem:[#allocation6 + $0x603]]
    %v645 = vstv %s644
    %v646 = vmul.f32 %v645, %v67
    %v647 = vmul.f32 %v645, %v68
    %v648 = vadd.f32 %v642, %v646
    %v649 = vadd.f32 %v643, %v647
    %v650 = vmax.f32 %v648, 0.0
    %v651 = vmax.f32 %v649, 0.0
    %v652 = vadd.f32 %v650, %v651
    %653 = vadd.xlane.f32.xlu0 %v652
    %v654 = vpop.xlane.xlu0 %653
    %v655 = vrot.slane %v654, 4
    %v656 = vadd.f32 %v654, %v655
    %v657 = vrot.slane %v656, 2
    %v658 = vadd.f32 %v656, %v657
    %v659 = vrot.slane %v658, 1
    %v660 = vadd.f32 %v658, %v659
    %s661 = vtos %v660
    %v662 = vstv %s661
    %v663 = vmul.f32 %v650, %v650
    %v664 = vmul.f32 %v651, %v651
    %v665 = vadd.f32 %v663, %v664
    %666 = vadd.xlane.f32.xlu0 %v665
    %v667 = vpop.xlane.xlu0 %666
    %v668 = vrot.slane %v667, 4
    %v669 = vadd.f32 %v667, %v668
    %v670 = vrot.slane %v669, 2
    %v671 = vadd.f32 %v669, %v670
    %v672 = vrot.slane %v671, 1
    %v673 = vadd.f32 %v671, %v672
    %s674 = vtos %v673
    %v675 = vstv %s674
    %s676 = sld [smem:[#allocation6 + $0x680]]
    %v677 = vstv %s676
    %v678 = vmul.f32 %v677, %v42
    %v679 = vmul.f32 %v677, %v43
    %s680 = sld [smem:[#allocation6 + $0x681]]
    %v681 = vstv %s680
    %v682 = vmul.f32 %v681, %v49
    %v683 = vmul.f32 %v681, %v50
    %v684 = vadd.f32 %v678, %v682
    %v685 = vadd.f32 %v679, %v683
    %s686 = sld [smem:[#allocation6 + $0x682]]
    %v687 = vstv %s686
    %v688 = vmul.f32 %v687, %v58
    %v689 = vmul.f32 %v687, %v59
    %v690 = vadd.f32 %v684, %v688
    %v691 = vadd.f32 %v685, %v689
    %s692 = sld [smem:[#allocation6 + $0x683]]
    %v693 = vstv %s692
    %v694 = vmul.f32 %v693, %v67
    %v695 = vmul.f32 %v693, %v68
    %v696 = vadd.f32 %v690, %v694
    %v697 = vadd.f32 %v691, %v695
    %v698 = vmax.f32 %v696, 0.0
    %v699 = vmax.f32 %v697, 0.0
    %v700 = vadd.f32 %v698, %v699
    %701 = vadd.xlane.f32.xlu0 %v700
    %v702 = vpop.xlane.xlu0 %701
    %v703 = vrot.slane %v702, 4
    %v704 = vadd.f32 %v702, %v703
    %v705 = vrot.slane %v704, 2
    %v706 = vadd.f32 %v704, %v705
    %v707 = vrot.slane %v706, 1
    %v708 = vadd.f32 %v706, %v707
    %s709 = vtos %v708
    %v710 = vstv %s709
    %v711 = vmul.f32 %v698, %v698
    %v712 = vmul.f32 %v699, %v699
    %v713 = vadd.f32 %v711, %v712
    %714 = vadd.xlane.f32.xlu0 %v713
    %v715 = vpop.xlane.xlu0 %714
    %v716 = vrot.slane %v715, 4
    %v717 = vadd.f32 %v715, %v716
    %v718 = vrot.slane %v717, 2
    %v719 = vadd.f32 %v717, %v718
    %v720 = vrot.slane %v719, 1
    %v721 = vadd.f32 %v719, %v720
    %s722 = vtos %v721
    %v723 = vstv %s722
    %s724 = sld [smem:[#allocation6 + $0x700]]
    %v725 = vstv %s724
    %v726 = vmul.f32 %v725, %v42
    %v727 = vmul.f32 %v725, %v43
    %s728 = sld [smem:[#allocation6 + $0x701]]
    %v729 = vstv %s728
    %v730 = vmul.f32 %v729, %v49
    %v731 = vmul.f32 %v729, %v50
    %v732 = vadd.f32 %v726, %v730
    %v733 = vadd.f32 %v727, %v731
    %s734 = sld [smem:[#allocation6 + $0x702]]
    %v735 = vstv %s734
    %v736 = vmul.f32 %v735, %v58
    %v737 = vmul.f32 %v735, %v59
    %v738 = vadd.f32 %v732, %v736
    %v739 = vadd.f32 %v733, %v737
    %s740 = sld [smem:[#allocation6 + $0x703]]
    %v741 = vstv %s740
    %v742 = vmul.f32 %v741, %v67
    %v743 = vmul.f32 %v741, %v68
    %v744 = vadd.f32 %v738, %v742
    %v745 = vadd.f32 %v739, %v743
    %v746 = vmax.f32 %v744, 0.0
    %v747 = vmax.f32 %v745, 0.0
    %v748 = vadd.f32 %v746, %v747
    %749 = vadd.xlane.f32.xlu0 %v748
    %v750 = vpop.xlane.xlu0 %749
    %v751 = vrot.slane %v750, 4
    %v752 = vadd.f32 %v750, %v751
    %v753 = vrot.slane %v752, 2
    %v754 = vadd.f32 %v752, %v753
    %v755 = vrot.slane %v754, 1
    %v756 = vadd.f32 %v754, %v755
    %s757 = vtos %v756
    %v758 = vstv %s757
    %v759 = vmul.f32 %v746, %v746
    %v760 = vmul.f32 %v747, %v747
    %v761 = vadd.f32 %v759, %v760
    %762 = vadd.xlane.f32.xlu0 %v761
    %v763 = vpop.xlane.xlu0 %762
    %v764 = vrot.slane %v763, 4
    %v765 = vadd.f32 %v763, %v764
    %v766 = vrot.slane %v765, 2
    %v767 = vadd.f32 %v765, %v766
    %v768 = vrot.slane %v767, 1
    %v769 = vadd.f32 %v767, %v768
    %s770 = vtos %v769
    %v771 = vstv %s770
    %s772 = sld [smem:[#allocation6 + $0x780]]
    %v773 = vstv %s772
    %v774 = vmul.f32 %v773, %v42
    %v775 = vmul.f32 %v773, %v43
    %s776 = sld [smem:[#allocation6 + $0x781]]
    %v777 = vstv %s776
    %v778 = vmul.f32 %v777, %v49
    %v779 = vmul.f32 %v777, %v50
    %v780 = vadd.f32 %v774, %v778
    %v781 = vadd.f32 %v775, %v779
    %s782 = sld [smem:[#allocation6 + $0x782]]
    %v783 = vstv %s782
    %v784 = vmul.f32 %v783, %v58
    %v785 = vmul.f32 %v783, %v59
    %v786 = vadd.f32 %v780, %v784
    %v787 = vadd.f32 %v781, %v785
    %s788 = sld [smem:[#allocation6 + $0x783]]
    %v789 = vstv %s788
    %v790 = vmul.f32 %v789, %v67
    %v791 = vmul.f32 %v789, %v68
    %v792 = vadd.f32 %v786, %v790
    %v793 = vadd.f32 %v787, %v791
    %v794 = vmax.f32 %v792, 0.0
    %v795 = vmax.f32 %v793, 0.0
    %v796 = vadd.f32 %v794, %v795
    %797 = vadd.xlane.f32.xlu0 %v796
    %v798 = vpop.xlane.xlu0 %797
    %v799 = vrot.slane %v798, 4
    %v800 = vadd.f32 %v798, %v799
    %v801 = vrot.slane %v800, 2
    %v802 = vadd.f32 %v800, %v801
    %v803 = vrot.slane %v802, 1
    %v804 = vadd.f32 %v802, %v803
    %s805 = vtos %v804
    %v806 = vstv %s805
    %v807 = vmul.f32 %v794, %v794
    %v808 = vmul.f32 %v795, %v795
    %v809 = vadd.f32 %v807, %v808
    %810 = vadd.xlane.f32.xlu0 %v809
    %v811 = vpop.xlane.xlu0 %810
    %v812 = vrot.slane %v811, 4
    %v813 = vadd.f32 %v811, %v812
    %v814 = vrot.slane %v813, 2
    %v815 = vadd.f32 %v813, %v814
    %v816 = vrot.slane %v815, 1
    %v817 = vadd.f32 %v815, %v816
    %s818 = vtos %v817
    %v819 = vstv %s818
    %vm820 = vcmask 7168
    %v821 = vsel %vm820, %v86, %v134
    %vm822 = vcmask 15360
    %v823 = vsel %vm822, %v821, %v182
    %vm824 = vcmask 23552
    %v825 = vsel %vm824, %v823, %v230
    %vm826 = vcmask 31744
    %v827 = vsel %vm826, %v825, %v278
    %vm828 = vcmask 39936
    %v829 = vsel %vm828, %v827, %v326
    %vm830 = vcmask 48128
    %v831 = vsel %vm830, %v829, %v374
    %vm832 = vcmask 56320
    %v833 = vsel %vm832, %v831, %v422
    %vm834 = vcmask 64512
    %v835 = vsel %vm834, %v833, %v470
    %vm836 = vcmask 72704
    %v837 = vsel %vm836, %v835, %v518
    %vm838 = vcmask 80896
    %v839 = vsel %vm838, %v837, %v566
    %vm840 = vcmask 89088
    %v841 = vsel %vm840, %v839, %v614
    %vm842 = vcmask 97280
    %v843 = vsel %vm842, %v841, %v662
    %vm844 = vcmask 105472
    %v845 = vsel %vm844, %v843, %v710
    %vm846 = vcmask 113664
    %v847 = vsel %vm846, %v845, %v758
    %vm848 = vcmask 121856
    %v849 = vsel %vm848, %v847, %v806
    %v850 = vsel %vm820, %v99, %v147
    %v851 = vsel %vm822, %v850, %v195
    %v852 = vsel %vm824, %v851, %v243
    %v853 = vsel %vm826, %v852, %v291
    %v854 = vsel %vm828, %v853, %v339
    %v855 = vsel %vm830, %v854, %v387
    %v856 = vsel %vm832, %v855, %v435
    %v857 = vsel %vm834, %v856, %v483
    %v858 = vsel %vm836, %v857, %v531
    %v859 = vsel %vm838, %v858, %v579
    %v860 = vsel %vm840, %v859, %v627
    %v861 = vsel %vm842, %v860, %v675
    %v862 = vsel %vm844, %v861, %v723
    %v863 = vsel %vm846, %v862, %v771
    %v864 = vsel %vm848, %v863, %v819
    %v866 = vrot.slane %v864, 7
    %vm868 = vcmask 1040384
    %v869 = vsel %vm868, %v849, %v866
    %vm870 = vcmask 123904
    %871 = vst.msk [vmem:[#allocation7] sm:$0x3] %vm870, %v869
    // Predicated region
    $region18: #{tpu_custom_call.1} parent=1 // pred_check
      _
    $region19: #{tpu_custom_call.1} parent=1 // pred_check_branch
      %873 = sbr.rel (0) target = $region21
    $region20: #{tpu_custom_call.1} parent=1 // pred_region
      %s875 = ssub.s32 32, 32
      %876 = vsyncadd [#allocation4], %s875
      %s878 = sshll.u32 [#allocation7], 4
      %s879 = int_to_ptr.vmem [resolvable:$true] %s878
      %881 = dma.vmem_to_hbm [thread:$0]  %s879, 32, %s2, [#allocation4]
    $region21: #{tpu_custom_call.1} parent=1 // pred_fallthru
      _
    // Predicated region
    $region22: #{tpu_custom_call.1} parent=1 // pred_check
      _
    $region23: #{tpu_custom_call.1} parent=1 // pred_check_branch
      %883 = sbr.rel (0) target = $region25
    $region24: #{tpu_custom_call.1} parent=1 // pred_region
      %884 = dma.done [#allocation4], 32
    $region25: #{tpu_custom_call.1} parent=1 // pred_fallthru
      _
    %885 = vsyncpa [#allocation3], 1
    %886 = vsyncpa [#allocation4], 1
    %887 = vsyncpa [#allocation5], 1

</llo_original>
